<compile_context>
chip_gen: v7x
topology: tpu7x:2x2x1
jax: 0.10.0
libtpu: 0.0.40
codegen_flags: <defaults>
</compile_context>

<pallas_src>
import jax
import jax.numpy as jnp
import numpy as np
from jax.experimental import pallas as pl
from jax.experimental.pallas import tpu as pltpu

_LANE = 128
_SUBLANE = 8


def _round_up(x, m):
    return ((x + m - 1) // m) * m


def _choose_tm(M, target_steps=4, max_tm=2048):
    """Row-tile size: aim for >= target_steps grid steps (>= 2 per TC on v7x
    megacore), multiple of 8 sublanes, capped so double-buffered tiles stay
    comfortably inside the default scoped VMEM on all generations."""
    tm = _round_up(max(1, pl.cdiv(M, target_steps)), _SUBLANE)
    return max(_SUBLANE, min(max_tm, tm))


def _ray_mlp_kernel(rays_ref, rv_ref,
                    w1_rays_ref, w1_rv_ref, b1_ref,
                    w2_ref, b2_ref, w3_ref, b3_ref, out_ref):
    """One (TM, ...) row-tile of the fused ray-MLP.

    Layer 1 is equivalent to concat([rays, rel_pos, vel, radius]) @ W1 + b1:
    W1 is split by rows (rays vs [rel_pos|vel]) so the concat never exists in
    HBM, and the constant radius column is pre-folded into b1 by the wrapper.
    Matmul operands are bf16 (native MXU dtype); accumulation, bias adds and
    ReLUs stay in f32.
    """
    rays_bf = rays_ref[...].astype(jnp.bfloat16)
    rv_bf = rv_ref[...].astype(jnp.bfloat16)

    # layer 1
    h = jnp.dot(rays_bf, w1_rays_ref[...], preferred_element_type=jnp.float32)
    h = h + jnp.dot(rv_bf, w1_rv_ref[...], preferred_element_type=jnp.float32)
    h = jnp.maximum(h + b1_ref[...], 0.0)

    # layer 2 (128-lane padded hidden width, single bf16 MXU pass)
    h = jnp.dot(h.astype(jnp.bfloat16), w2_ref[...],
                preferred_element_type=jnp.float32) + b2_ref[...]
    h = jnp.maximum(h, 0.0)

    # output layer: unpadded Dout columns, written directly (masked store)
    o = jnp.dot(h.astype(jnp.bfloat16), w3_ref[...],
                preferred_element_type=jnp.float32) + b3_ref[...]
    out_ref[...] = o.astype(out_ref.dtype)


def ray_model_static_size_wrapper(rays, rel_pos, vel, params, input_radius,
                                  robot_radius=None, hiddens=None):
    """JAX/Pallas equivalent of RayModelStaticSizeWrapper.forward."""
    # TODO(synk): recurrent `hiddens` path of the wrapped model is not
    # implemented (demo inner model is feed-forward); hiddens must be None.
    assert hiddens is None
    # TODO(synk): explicit per-step robot_radius tensor path not wired into the
    # kernel; the wrapper's default (None -> constant torch.full fill) is the
    # exercised path and is folded exactly into b1 below.
    assert robot_radius is None

    B, S, R = rays.shape
    M = B * S

    w1x, w1r, b1, w2, b2, w3, b3 = params
    D, H = w1x.shape
    assert D == R + 6, "W1 must cover [rays | rel_pos | vel]"
    Dout = w3.shape[1]
    Hp = _round_up(H, _LANE)  # lane-pad hidden width (exact: ReLU(0)=0)

    # Fold the constant robot_radius column of W1 into the bias (exact, f32):
    #   concat([x, r*ones]) @ W1 + b1 == x @ W1[:D] + (b1 + r * W1[D]).
    b1_eff = b1 + jnp.float32(input_radius) * w1r

    def pad_cols(a, n):
        return jnp.pad(a, ((0, 0), (0, n - a.shape[1])))

    # Weights -> bf16 (native MXU dtype); biases stay f32.
    w1_rays = pad_cols(w1x[:R], Hp).astype(jnp.bfloat16)          # (R, Hp)
    w1_rv = pad_cols(w1x[R:R + 6], Hp).astype(jnp.bfloat16)       # (6, Hp)
    b1_p = pad_cols(b1_eff, Hp)                                   # (1, Hp) f32
    w2_p = jnp.pad(w2, ((0, Hp - H), (0, Hp - H))).astype(jnp.bfloat16)  # (Hp, Hp)
    b2_p = pad_cols(b2, Hp)                                       # (1, Hp) f32
    w3_p = jnp.pad(w3, ((0, Hp - H), (0, 0))).astype(jnp.bfloat16)       # (Hp, Dout)
    b3_p = b3                                                     # (1, Dout) f32

    rays2d = rays.reshape(M, R)
    rv2d = jnp.concatenate([rel_pos.reshape(M, 3), vel.reshape(M, 3)], axis=1)

    TM = _choose_tm(M)
    grid_n = pl.cdiv(M, TM)
    Mp = grid_n * TM
    if Mp != M:
        # Zero-pad a handful of rows; padded output rows are sliced off below.
        rays2d = jnp.pad(rays2d, ((0, Mp - M), (0, 0)))
        rv2d = jnp.pad(rv2d, ((0, Mp - M), (0, 0)))

    flops = 2 * Mp * ((R + 6) * Hp + Hp * Hp + Hp * Dout)
    bytes_accessed = (4 * Mp * (R + 6)                 # f32 activations in
                      + 4 * Mp * Dout                  # f32 unpadded output
                      + 2 * ((R + 6) * Hp + Hp * Hp + Hp * Dout)  # bf16 weights
                      + 4 * (2 * Hp + Dout))           # f32 biases

    out2d = pl.pallas_call(
        _ray_mlp_kernel,
        out_shape=jax.ShapeDtypeStruct((Mp, Dout), jnp.float32),
        grid=(grid_n,),
        in_specs=[
            pl.BlockSpec((TM, R), lambda i: (i, 0)),      # rays row-tile (f32)
            pl.BlockSpec((TM, 6), lambda i: (i, 0)),      # [rel_pos|vel] row-tile
            pl.BlockSpec((R, Hp), lambda i: (0, 0)),      # W1 rows for rays (bf16)
            pl.BlockSpec((6, Hp), lambda i: (0, 0)),      # W1 rows for rel|vel (bf16)
            pl.BlockSpec((1, Hp), lambda i: (0, 0)),      # b1 (+ radius fold, f32)
            pl.BlockSpec((Hp, Hp), lambda i: (0, 0)),     # W2 (bf16)
            pl.BlockSpec((1, Hp), lambda i: (0, 0)),      # b2 (f32)
            pl.BlockSpec((Hp, Dout), lambda i: (0, 0)),   # W3 (bf16, unpadded cols)
            pl.BlockSpec((1, Dout), lambda i: (0, 0)),    # b3 (f32)
        ],
        out_specs=pl.BlockSpec((TM, Dout), lambda i: (i, 0)),
        compiler_params=pltpu.CompilerParams(
            dimension_semantics=("parallel",)),
        cost_estimate=pl.CostEstimate(
            flops=int(flops), transcendentals=0,
            bytes_accessed=int(bytes_accessed)),
    )(rays2d, rv2d, w1_rays, w1_rv, b1_p, w2_p, b2_p, w3_p, b3_p)

    if Mp != M:
        out2d = out2d[:M]
    return out2d.reshape(B, S, Dout)


if __name__ == "__main__":
    key = jax.random.PRNGKey(0)
    B, S, R, H, Dout = 2, 512, 58, 32, 3      # small demo shapes
    D = R + 6                                 # rays + rel_pos(3) + vel(3)
    input_radius = 0.35

    ks = jax.random.split(key, 9)
    rays = jax.random.uniform(ks[0], (B, S, R), jnp.float32)
    rel_pos = jax.random.normal(ks[1], (B, S, 3), jnp.float32)
    vel = jax.random.normal(ks[2], (B, S, 3), jnp.float32)

    # deterministic synthetic parameters for the wrapped ray model
    w1_full = jax.random.normal(ks[3], (D + 1, H), jnp.float32) * 0.1
    w1x, w1r = w1_full[:D], w1_full[D:D + 1]
    b1 = jax.random.normal(ks[4], (1, H), jnp.float32) * 0.1
    w2 = jax.random.normal(ks[5], (H, H), jnp.float32) * 0.1
    b2 = jax.random.normal(ks[6], (1, H), jnp.float32) * 0.1
    w3 = jax.random.normal(ks[7], (H, Dout), jnp.float32) * 0.1
    b3 = jax.random.normal(ks[8], (1, Dout), jnp.float32) * 0.1
    params = (w1x, w1r, b1, w2, b2, w3, b3)

    out = ray_model_static_size_wrapper(rays, rel_pos, vel, params, input_radius)
    out = jax.block_until_ready(out)

    # pure-JAX f32 reference of the exact wrapper semantics (full() + concat).
    robot_radius = jnp.full((B, S, 1), input_radius, jnp.float32)
    x = jnp.concatenate([rays, rel_pos, vel, robot_radius], axis=-1).reshape(B * S, D + 1)
    h = jnp.maximum(x @ w1_full + b1, 0.0)
    h = jnp.maximum(h @ w2 + b2, 0.0)
    ref = (h @ w3 + b3).reshape(B, S, Dout)

    # Tolerance loosened vs the pure-f32 version: matmul operands run in bf16
    # (f32 accumulation), which the reference intentionally does not emulate.
    np.testing.assert_allclose(np.asarray(out), np.asarray(ref), rtol=3e-2, atol=3e-2)
    print("KERNEL_OK")
</pallas_src>

<mosaic_0001>
module attributes {stable_mosaic.version = 11 : i64} {
  func.func @_ray_mlp_kernel(%arg0: i32, %arg1: memref<256x58xf32, #tpu.memory_space<vmem>>, %arg2: memref<256x6xf32, #tpu.memory_space<vmem>>, %arg3: memref<58x128xbf16, #tpu.memory_space<vmem>>, %arg4: memref<6x128xbf16, #tpu.memory_space<vmem>>, %arg5: memref<1x128xf32, #tpu.memory_space<vmem>>, %arg6: memref<128x128xbf16, #tpu.memory_space<vmem>>, %arg7: memref<1x128xf32, #tpu.memory_space<vmem>>, %arg8: memref<128x3xbf16, #tpu.memory_space<vmem>>, %arg9: memref<1x3xf32, #tpu.memory_space<vmem>>, %arg10: memref<256x3xf32, #tpu.memory_space<vmem>>) attributes {dimension_semantics = [#tpu.dimension_semantics<parallel>], iteration_bounds = array<i64: 4>, scalar_prefetch = 0 : i64, scratch_operands = 0 : i64, tpu.core_type = #tpu.core_type<tc>, window_params = [{transform_indices = @transform_0, window_bounds = array<i64: 256, 58>}, {transform_indices = @transform_1, window_bounds = array<i64: 256, 6>}, {pipeline_mode = #tpu.pipeline_mode<synchronous>, transform_indices = @transform_2, window_bounds = array<i64: 58, 128>}, {pipeline_mode = #tpu.pipeline_mode<synchronous>, transform_indices = @transform_3, window_bounds = array<i64: 6, 128>}, {pipeline_mode = #tpu.pipeline_mode<synchronous>, transform_indices = @transform_4, window_bounds = array<i64: 1, 128>}, {pipeline_mode = #tpu.pipeline_mode<synchronous>, transform_indices = @transform_5, window_bounds = array<i64: 128, 128>}, {pipeline_mode = #tpu.pipeline_mode<synchronous>, transform_indices = @transform_6, window_bounds = array<i64: 1, 128>}, {pipeline_mode = #tpu.pipeline_mode<synchronous>, transform_indices = @transform_7, window_bounds = array<i64: 128, 3>}, {pipeline_mode = #tpu.pipeline_mode<synchronous>, transform_indices = @transform_8, window_bounds = array<i64: 1, 3>}, {transform_indices = @transform_9, window_bounds = array<i64: 256, 3>}]} {
    %c0 = arith.constant 0 : index
    %c0_0 = arith.constant 0 : index
    %0 = vector.load %arg1[%c0, %c0_0] : memref<256x58xf32, #tpu.memory_space<vmem>>, vector<256x58xf32>
    %1 = arith.truncf %0 : vector<256x58xf32> to vector<256x58xbf16>
    %c0_1 = arith.constant 0 : index
    %c0_2 = arith.constant 0 : index
    %2 = vector.load %arg2[%c0_1, %c0_2] : memref<256x6xf32, #tpu.memory_space<vmem>>, vector<256x6xf32>
    %3 = arith.truncf %2 : vector<256x6xf32> to vector<256x6xbf16>
    %c0_3 = arith.constant 0 : index
    %c0_4 = arith.constant 0 : index
    %4 = vector.load %arg3[%c0_3, %c0_4] : memref<58x128xbf16, #tpu.memory_space<vmem>>, vector<58x128xbf16>
    %cst = arith.constant dense<0.000000e+00> : vector<256x128xf32>
    %5 = tpu.matmul %1, %4, %cst {dimension_numbers = #tpu.dot_dimension_numbers<[1], [0], [0], [1], [0, 0, 1, 1], [], []>} : vector<256x58xbf16>, vector<58x128xbf16>, vector<256x128xf32> -> vector<256x128xf32>
    %c0_5 = arith.constant 0 : index
    %c0_6 = arith.constant 0 : index
    %6 = vector.load %arg4[%c0_5, %c0_6] : memref<6x128xbf16, #tpu.memory_space<vmem>>, vector<6x128xbf16>
    %cst_7 = arith.constant dense<0.000000e+00> : vector<256x128xf32>
    %7 = tpu.matmul %3, %6, %cst_7 {dimension_numbers = #tpu.dot_dimension_numbers<[1], [0], [0], [1], [0, 0, 1, 1], [], []>} : vector<256x6xbf16>, vector<6x128xbf16>, vector<256x128xf32> -> vector<256x128xf32>
    %8 = arith.addf %5, %7 : vector<256x128xf32>
    %c0_8 = arith.constant 0 : index
    %c0_9 = arith.constant 0 : index
    %9 = vector.load %arg5[%c0_8, %c0_9] : memref<1x128xf32, #tpu.memory_space<vmem>>, vector<1x128xf32>
    %10 = vector.broadcast %9 : vector<1x128xf32> to vector<256x128xf32>
    %11 = arith.addf %8, %10 : vector<256x128xf32>
    %cst_10 = arith.constant 0.000000e+00 : f32
    %12 = vector.broadcast %cst_10 : f32 to vector<256x128xf32>
    %13 = arith.maximumf %11, %12 : vector<256x128xf32>
    %14 = arith.truncf %13 : vector<256x128xf32> to vector<256x128xbf16>
    %c0_11 = arith.constant 0 : index
    %c0_12 = arith.constant 0 : index
    %15 = vector.load %arg6[%c0_11, %c0_12] : memref<128x128xbf16, #tpu.memory_space<vmem>>, vector<128x128xbf16>
    %cst_13 = arith.constant dense<0.000000e+00> : vector<256x128xf32>
    %16 = tpu.matmul %14, %15, %cst_13 {dimension_numbers = #tpu.dot_dimension_numbers<[1], [0], [0], [1], [0, 0, 1, 1], [], []>} : vector<256x128xbf16>, vector<128x128xbf16>, vector<256x128xf32> -> vector<256x128xf32>
    %c0_14 = arith.constant 0 : index
    %c0_15 = arith.constant 0 : index
    %17 = vector.load %arg7[%c0_14, %c0_15] : memref<1x128xf32, #tpu.memory_space<vmem>>, vector<1x128xf32>
    %18 = vector.broadcast %17 : vector<1x128xf32> to vector<256x128xf32>
    %19 = arith.addf %16, %18 : vector<256x128xf32>
    %cst_16 = arith.constant 0.000000e+00 : f32
    %20 = vector.broadcast %cst_16 : f32 to vector<256x128xf32>
    %21 = arith.maximumf %19, %20 : vector<256x128xf32>
    %22 = arith.truncf %21 : vector<256x128xf32> to vector<256x128xbf16>
    %c0_17 = arith.constant 0 : index
    %c0_18 = arith.constant 0 : index
    %23 = vector.load %arg8[%c0_17, %c0_18] : memref<128x3xbf16, #tpu.memory_space<vmem>>, vector<128x3xbf16>
    %cst_19 = arith.constant dense<0.000000e+00> : vector<256x3xf32>
    %24 = tpu.matmul %22, %23, %cst_19 {dimension_numbers = #tpu.dot_dimension_numbers<[1], [0], [0], [1], [0, 0, 1, 1], [], []>} : vector<256x128xbf16>, vector<128x3xbf16>, vector<256x3xf32> -> vector<256x3xf32>
    %c0_20 = arith.constant 0 : index
    %c0_21 = arith.constant 0 : index
    %25 = vector.load %arg9[%c0_20, %c0_21] : memref<1x3xf32, #tpu.memory_space<vmem>>, vector<1x3xf32>
    %26 = vector.broadcast %25 : vector<1x3xf32> to vector<256x3xf32>
    %27 = arith.addf %24, %26 : vector<256x3xf32>
    %c0_22 = arith.constant 0 : index
    %c0_23 = arith.constant 0 : index
    %28 = vector.load %arg10[%c0_22, %c0_23] : memref<256x3xf32, #tpu.memory_space<vmem>>, vector<256x3xf32>
    tpu.vector_store %arg10[%c0_22, %c0_23], %27 {strides = array<i32>} : memref<256x3xf32, #tpu.memory_space<vmem>>, vector<256x3xf32>,
    return
  }
  func.func @transform_0(%arg0: i32) -> (i32, i32) {
    %c0_i32 = arith.constant 0 : i32
    %c0_i32_0 = arith.constant 0 : i32
    return %arg0, %c0_i32 : i32, i32
  }
  func.func @transform_1(%arg0: i32) -> (i32, i32) {
    %c0_i32 = arith.constant 0 : i32
    %c0_i32_0 = arith.constant 0 : i32
    return %arg0, %c0_i32 : i32, i32
  }
  func.func @transform_2(%arg0: i32) -> (i32, i32) {
    %c0_i32 = arith.constant 0 : i32
    %c0_i32_0 = arith.constant 0 : i32
    %c0_i32_1 = arith.constant 0 : i32
    return %c0_i32, %c0_i32_0 : i32, i32
  }
  func.func @transform_3(%arg0: i32) -> (i32, i32) {
    %c0_i32 = arith.constant 0 : i32
    %c0_i32_0 = arith.constant 0 : i32
    %c0_i32_1 = arith.constant 0 : i32
    return %c0_i32, %c0_i32_0 : i32, i32
  }
  func.func @transform_4(%arg0: i32) -> (i32, i32) {
    %c0_i32 = arith.constant 0 : i32
    %c0_i32_0 = arith.constant 0 : i32
    %c0_i32_1 = arith.constant 0 : i32
    return %c0_i32, %c0_i32_0 : i32, i32
  }
  func.func @transform_5(%arg0: i32) -> (i32, i32) {
    %c0_i32 = arith.constant 0 : i32
    %c0_i32_0 = arith.constant 0 : i32
    %c0_i32_1 = arith.constant 0 : i32
    return %c0_i32, %c0_i32_0 : i32, i32
  }
  func.func @transform_6(%arg0: i32) -> (i32, i32) {
    %c0_i32 = arith.constant 0 : i32
    %c0_i32_0 = arith.constant 0 : i32
    %c0_i32_1 = arith.constant 0 : i32
    return %c0_i32, %c0_i32_0 : i32, i32
  }
  func.func @transform_7(%arg0: i32) -> (i32, i32) {
    %c0_i32 = arith.constant 0 : i32
    %c0_i32_0 = arith.constant 0 : i32
    %c0_i32_1 = arith.constant 0 : i32
    return %c0_i32, %c0_i32_0 : i32, i32
  }
  func.func @transform_8(%arg0: i32) -> (i32, i32) {
    %c0_i32 = arith.constant 0 : i32
    %c0_i32_0 = arith.constant 0 : i32
    %c0_i32_1 = arith.constant 0 : i32
    return %c0_i32, %c0_i32_0 : i32, i32
  }
  func.func @transform_9(%arg0: i32) -> (i32, i32) {
    %c0_i32 = arith.constant 0 : i32
    %c0_i32_0 = arith.constant 0 : i32
    return %arg0, %c0_i32 : i32, i32
  }
}

</mosaic_0001>

<llo_original>
// kernel: tpu_custom_call.1
$region0: #{tpu_custom_call.1}
  #allocation0 [shape = 'u32[]', space=smem, size = 0x4, offset = 0x4, fixed_abs, tag = 'smem constant byte address 0x4 - core index']
  #allocation1 [shape = 'u32[144,128]{1,0:T(1,128)}', space=vmem, size = 0x12000, scoped, tag = 'internal scratch']
  %s0 = inlined_call_operand.vmem [shape: f32[1024,58], index: 0, kind: input, shape index: {}]
  %s1 = inlined_call_operand.vmem [shape: f32[1024,6], index: 1, kind: input, shape index: {}]
  %s2 = inlined_call_operand.vmem [shape: bf16[58,128], index: 2, kind: input, shape index: {}]
  %s3 = inlined_call_operand.vmem [shape: bf16[6,128], index: 3, kind: input, shape index: {}]
  %s4 = inlined_call_operand.vmem [shape: f32[1,128], index: 4, kind: input, shape index: {}]
  %s5 = inlined_call_operand.vmem [shape: bf16[128,128], index: 5, kind: input, shape index: {}]
  %s6 = inlined_call_operand.vmem [shape: f32[1,128], index: 6, kind: input, shape index: {}]
  %s7 = inlined_call_operand.vmem [shape: bf16[128,3], index: 7, kind: input, shape index: {}]
  %s8 = inlined_call_operand.vmem [shape: f32[1,3], index: 8, kind: input, shape index: {}]
  %s9 = inlined_call_operand.vmem [shape: f32[1024,3], index: 9, kind: output, shape index: {}]
  %s10 = sld [smem:[#allocation0]]
  $region69: #{tpu_custom_call.1} parent=0
    _
  %s12 = ssub.s32 1, %s10
  %s13 = scalar_select 0, %s12, %s10
  loop: start=0, step=1, limit=6
  $region2: #{tpu_custom_call.1} parent=0 // loop_pre_header
    _
  $region3: #{tpu_custom_call.1} parent=0 // loop_header
    %s15 = sphi 0, %s19
    %p16 = scmp.ge.s32.totalorder %s15, 6
    %s25 = sphi 0, %s27
    %s28 = sphi 0, %s25
    %s29 = sphi 0, %s28
    %s45 = sphi 0, %s29
    %s51 = sphi 0, %s53
    %s54 = sphi 0, %s51
    %s55 = sphi 0, %s54
    %s71 = sphi 0, %s55
    %s75 = sphi 0, %s75
    %s77 = sphi 0, %s75
    %s78 = sphi 0, %s77
    %s92 = sphi 0, %s78
    %s96 = sphi 0, %s96
    %s98 = sphi 0, %s96
    %s99 = sphi 0, %s98
    %s113 = sphi 0, %s99
    %s117 = sphi 0, %s117
    %s119 = sphi 0, %s117
    %s120 = sphi 0, %s119
    %s134 = sphi 0, %s120
    %s138 = sphi 0, %s138
    %s140 = sphi 0, %s138
    %s141 = sphi 0, %s140
    %s155 = sphi 0, %s141
    %s159 = sphi 0, %s159
    %s161 = sphi 0, %s159
    %s162 = sphi 0, %s161
    %s176 = sphi 0, %s162
    %s180 = sphi 0, %s180
    %s182 = sphi 0, %s180
    %s183 = sphi 0, %s182
    %s197 = sphi 0, %s183
    %s201 = sphi 0, %s201
    %s203 = sphi 0, %s201
    %s204 = sphi 0, %s203
    %s218 = sphi 0, %s204
    %s224 = sphi 0, %s226
    %s227 = sphi 0, %s224
    %s228 = sphi 0, %s227
    %s244 = sphi 0, %s228
  $region4: #{tpu_custom_call.1} parent=0 // loop_header_branch
    %18 = sbr.rel (%p16) target = $region8
  $region5: #{tpu_custom_call.1} parent=0 // loop_body
    %s20 = ssub.s32 %s15, 1
    %s21 = ssub.s32 %s15, 2
    %s22 = sadd.s32 %s15, 1
    %s23 = ssub.s32 %s15, %s22
    %p24 = scmp.eq.s32.totalorder %s23, 0
    %s26 = sadd.s32 %s25, 1
    %s27 = scalar_select %p24, %s25, %s26
    %p30 = pneg %p24
    %p31 = scmp.eq.s32.totalorder %s15, 3
    %p32 = por %p30, %p31
    %p33 = scmp.ne.s32.totalorder %s25, %s28
    %p34 = scmp.eq.s32.totalorder %s15, 0
    %p35 = por %p33, %p34
    %p36 = scmp.ne.s32.totalorder %s25, %s28
    %p37 = scmp.eq.s32.totalorder %s20, 3
    %p38 = por %p36, %p37
    %p39 = scmp.ne.s32.totalorder %s28, %s29
    %p40 = scmp.eq.s32.totalorder %s20, 0
    %p41 = por %p39, %p40
    %p42 = scmp.ne.s32.totalorder %s28, %s29
    %p43 = scmp.eq.s32.totalorder %s21, 3
    %p44 = por %p42, %p43
    %p46 = scmp.ne.s32.totalorder %s29, %s45
    %p47 = scmp.eq.s32.totalorder %s21, 0
    %p48 = por %p46, %p47
    %s49 = ssub.s32 %s15, %s22
    %p50 = scmp.eq.s32.totalorder %s49, 0
    %s52 = sadd.s32 %s51, 1
    %s53 = scalar_select %p50, %s51, %s52
    %p56 = pneg %p50
    %p57 = scmp.eq.s32.totalorder %s15, 3
    %p58 = por %p56, %p57
    %p59 = scmp.ne.s32.totalorder %s51, %s54
    %p60 = scmp.eq.s32.totalorder %s15, 0
    %p61 = por %p59, %p60
    %p62 = scmp.ne.s32.totalorder %s51, %s54
    %p63 = scmp.eq.s32.totalorder %s20, 3
    %p64 = por %p62, %p63
    %p65 = scmp.ne.s32.totalorder %s54, %s55
    %p66 = scmp.eq.s32.totalorder %s20, 0
    %p67 = por %p65, %p66
    %p68 = scmp.ne.s32.totalorder %s54, %s55
    %p69 = scmp.eq.s32.totalorder %s21, 3
    %p70 = por %p68, %p69
    %p72 = scmp.ne.s32.totalorder %s55, %s71
    %p73 = scmp.eq.s32.totalorder %s21, 0
    %p74 = por %p72, %p73
    %s76 = sadd.s32 %s75, 1
    %p79 = scmp.eq.s32.totalorder %s15, 3
    %p80 = scmp.ne.s32.totalorder %s75, %s77
    %p81 = scmp.eq.s32.totalorder %s15, 0
    %p82 = por %p80, %p81
    %p83 = scmp.ne.s32.totalorder %s75, %s77
    %p84 = scmp.eq.s32.totalorder %s20, 3
    %p85 = por %p83, %p84
    %p86 = scmp.ne.s32.totalorder %s77, %s78
    %p87 = scmp.eq.s32.totalorder %s20, 0
    %p88 = por %p86, %p87
    %p89 = scmp.ne.s32.totalorder %s77, %s78
    %p90 = scmp.eq.s32.totalorder %s21, 3
    %p91 = por %p89, %p90
    %p93 = scmp.ne.s32.totalorder %s78, %s92
    %p94 = scmp.eq.s32.totalorder %s21, 0
    %p95 = por %p93, %p94
    %s97 = sadd.s32 %s96, 1
    %p100 = scmp.eq.s32.totalorder %s15, 3
    %p101 = scmp.ne.s32.totalorder %s96, %s98
    %p102 = scmp.eq.s32.totalorder %s15, 0
    %p103 = por %p101, %p102
    %p104 = scmp.ne.s32.totalorder %s96, %s98
    %p105 = scmp.eq.s32.totalorder %s20, 3
    %p106 = por %p104, %p105
    %p107 = scmp.ne.s32.totalorder %s98, %s99
    %p108 = scmp.eq.s32.totalorder %s20, 0
    %p109 = por %p107, %p108
    %p110 = scmp.ne.s32.totalorder %s98, %s99
    %p111 = scmp.eq.s32.totalorder %s21, 3
    %p112 = por %p110, %p111
    %p114 = scmp.ne.s32.totalorder %s99, %s113
    %p115 = scmp.eq.s32.totalorder %s21, 0
    %p116 = por %p114, %p115
    %s118 = sadd.s32 %s117, 1
    %p121 = scmp.eq.s32.totalorder %s15, 3
    %p122 = scmp.ne.s32.totalorder %s117, %s119
    %p123 = scmp.eq.s32.totalorder %s15, 0
    %p124 = por %p122, %p123
    %p125 = scmp.ne.s32.totalorder %s117, %s119
    %p126 = scmp.eq.s32.totalorder %s20, 3
    %p127 = por %p125, %p126
    %p128 = scmp.ne.s32.totalorder %s119, %s120
    %p129 = scmp.eq.s32.totalorder %s20, 0
    %p130 = por %p128, %p129
    %p131 = scmp.ne.s32.totalorder %s119, %s120
    %p132 = scmp.eq.s32.totalorder %s21, 3
    %p133 = por %p131, %p132
    %p135 = scmp.ne.s32.totalorder %s120, %s134
    %p136 = scmp.eq.s32.totalorder %s21, 0
    %p137 = por %p135, %p136
    %s139 = sadd.s32 %s138, 1
    %p142 = scmp.eq.s32.totalorder %s15, 3
    %p143 = scmp.ne.s32.totalorder %s138, %s140
    %p144 = scmp.eq.s32.totalorder %s15, 0
    %p145 = por %p143, %p144
    %p146 = scmp.ne.s32.totalorder %s138, %s140
    %p147 = scmp.eq.s32.totalorder %s20, 3
    %p148 = por %p146, %p147
    %p149 = scmp.ne.s32.totalorder %s140, %s141
    %p150 = scmp.eq.s32.totalorder %s20, 0
    %p151 = por %p149, %p150
    %p152 = scmp.ne.s32.totalorder %s140, %s141
    %p153 = scmp.eq.s32.totalorder %s21, 3
    %p154 = por %p152, %p153
    %p156 = scmp.ne.s32.totalorder %s141, %s155
    %p157 = scmp.eq.s32.totalorder %s21, 0
    %p158 = por %p156, %p157
    %s160 = sadd.s32 %s159, 1
    %p163 = scmp.eq.s32.totalorder %s15, 3
    %p164 = scmp.ne.s32.totalorder %s159, %s161
    %p165 = scmp.eq.s32.totalorder %s15, 0
    %p166 = por %p164, %p165
    %p167 = scmp.ne.s32.totalorder %s159, %s161
    %p168 = scmp.eq.s32.totalorder %s20, 3
    %p169 = por %p167, %p168
    %p170 = scmp.ne.s32.totalorder %s161, %s162
    %p171 = scmp.eq.s32.totalorder %s20, 0
    %p172 = por %p170, %p171
    %p173 = scmp.ne.s32.totalorder %s161, %s162
    %p174 = scmp.eq.s32.totalorder %s21, 3
    %p175 = por %p173, %p174
    %p177 = scmp.ne.s32.totalorder %s162, %s176
    %p178 = scmp.eq.s32.totalorder %s21, 0
    %p179 = por %p177, %p178
    %s181 = sadd.s32 %s180, 1
    %p184 = scmp.eq.s32.totalorder %s15, 3
    %p185 = scmp.ne.s32.totalorder %s180, %s182
    %p186 = scmp.eq.s32.totalorder %s15, 0
    %p187 = por %p185, %p186
    %p188 = scmp.ne.s32.totalorder %s180, %s182
    %p189 = scmp.eq.s32.totalorder %s20, 3
    %p190 = por %p188, %p189
    %p191 = scmp.ne.s32.totalorder %s182, %s183
    %p192 = scmp.eq.s32.totalorder %s20, 0
    %p193 = por %p191, %p192
    %p194 = scmp.ne.s32.totalorder %s182, %s183
    %p195 = scmp.eq.s32.totalorder %s21, 3
    %p196 = por %p194, %p195
    %p198 = scmp.ne.s32.totalorder %s183, %s197
    %p199 = scmp.eq.s32.totalorder %s21, 0
    %p200 = por %p198, %p199
    %s202 = sadd.s32 %s201, 1
    %p205 = scmp.eq.s32.totalorder %s15, 3
    %p206 = scmp.ne.s32.totalorder %s201, %s203
    %p207 = scmp.eq.s32.totalorder %s15, 0
    %p208 = por %p206, %p207
    %p209 = scmp.ne.s32.totalorder %s201, %s203
    %p210 = scmp.eq.s32.totalorder %s20, 3
    %p211 = por %p209, %p210
    %p212 = scmp.ne.s32.totalorder %s203, %s204
    %p213 = scmp.eq.s32.totalorder %s20, 0
    %p214 = por %p212, %p213
    %p215 = scmp.ne.s32.totalorder %s203, %s204
    %p216 = scmp.eq.s32.totalorder %s21, 3
    %p217 = por %p215, %p216
    %p219 = scmp.ne.s32.totalorder %s204, %s218
    %p220 = scmp.eq.s32.totalorder %s21, 0
    %p221 = por %p219, %p220
    %s222 = ssub.s32 %s15, %s22
    %p223 = scmp.eq.s32.totalorder %s222, 0
    %s225 = sadd.s32 %s224, 1
    %s226 = scalar_select %p223, %s224, %s225
    %p229 = pneg %p223
    %p230 = scmp.eq.s32.totalorder %s15, 3
    %p231 = por %p229, %p230
    %p232 = scmp.ne.s32.totalorder %s224, %s227
    %p233 = scmp.eq.s32.totalorder %s15, 0
    %p234 = por %p232, %p233
    %p235 = scmp.ne.s32.totalorder %s224, %s227
    %p236 = scmp.eq.s32.totalorder %s20, 3
    %p237 = por %p235, %p236
    %p238 = scmp.ne.s32.totalorder %s227, %s228
    %p239 = scmp.eq.s32.totalorder %s20, 0
    %p240 = por %p238, %p239
    %p241 = scmp.ne.s32.totalorder %s227, %s228
    %p242 = scmp.eq.s32.totalorder %s21, 3
    %p243 = por %p241, %p242
    %p245 = scmp.ne.s32.totalorder %s228, %s244
    %p246 = scmp.eq.s32.totalorder %s21, 0
    %p247 = por %p245, %p246
    %p248 = scmp.le.s32.totalorder 1, %s15
    %p249 = scmp.lt.s32.totalorder %s15, 5
    %p250 = pnand %p248, %p249
    %p251 = pneg %p250
    // Predicated region
    $region9: #{tpu_custom_call.1} parent=5 // pred_check
      _
    $region10: #{tpu_custom_call.1} parent=5 // pred_check_branch
      %253 = sbr.rel (%p250) target = $region12
    $region11: #{tpu_custom_call.1} parent=5 // pred_region
      %s254 = ssub.s32 %s15, 1
      // Predicated region
      $region13: #{tpu_custom_call.1} parent=11 // pred_check
        %p255 = pneg %p88
      $region14: #{tpu_custom_call.1} parent=11 // pred_check_branch
        %257 = sbr.rel (%p255) target = $region16
      $region15: #{tpu_custom_call.1} parent=11 // pred_region
        _
      $region16: #{tpu_custom_call.1} parent=11 // pred_fallthru
        _
      // Predicated region
      $region17: #{tpu_custom_call.1} parent=11 // pred_check
        %p258 = pneg %p109
      $region18: #{tpu_custom_call.1} parent=11 // pred_check_branch
        %260 = sbr.rel (%p258) target = $region20
      $region19: #{tpu_custom_call.1} parent=11 // pred_region
        _
      $region20: #{tpu_custom_call.1} parent=11 // pred_fallthru
        _
      // Predicated region
      $region21: #{tpu_custom_call.1} parent=11 // pred_check
        %p261 = pneg %p130
      $region22: #{tpu_custom_call.1} parent=11 // pred_check_branch
        %263 = sbr.rel (%p261) target = $region24
      $region23: #{tpu_custom_call.1} parent=11 // pred_region
        _
      $region24: #{tpu_custom_call.1} parent=11 // pred_fallthru
        _
      // Predicated region
      $region25: #{tpu_custom_call.1} parent=11 // pred_check
        %p264 = pneg %p151
      $region26: #{tpu_custom_call.1} parent=11 // pred_check_branch
        %266 = sbr.rel (%p264) target = $region28
      $region27: #{tpu_custom_call.1} parent=11 // pred_region
        _
      $region28: #{tpu_custom_call.1} parent=11 // pred_fallthru
        _
      // Predicated region
      $region29: #{tpu_custom_call.1} parent=11 // pred_check
        %p267 = pneg %p172
      $region30: #{tpu_custom_call.1} parent=11 // pred_check_branch
        %269 = sbr.rel (%p267) target = $region32
      $region31: #{tpu_custom_call.1} parent=11 // pred_region
        _
      $region32: #{tpu_custom_call.1} parent=11 // pred_fallthru
        _
      // Predicated region
      $region33: #{tpu_custom_call.1} parent=11 // pred_check
        %p270 = pneg %p193
      $region34: #{tpu_custom_call.1} parent=11 // pred_check_branch
        %272 = sbr.rel (%p270) target = $region36
      $region35: #{tpu_custom_call.1} parent=11 // pred_region
        _
      $region36: #{tpu_custom_call.1} parent=11 // pred_fallthru
        _
      // Predicated region
      $region37: #{tpu_custom_call.1} parent=11 // pred_check
        %p273 = pneg %p214
      $region38: #{tpu_custom_call.1} parent=11 // pred_check_branch
        %275 = sbr.rel (%p273) target = $region40
      $region39: #{tpu_custom_call.1} parent=11 // pred_region
        _
      $region40: #{tpu_custom_call.1} parent=11 // pred_fallthru
        _
    $region12: #{tpu_custom_call.1} parent=5 // pred_fallthru
      _
    %p276 = scmp.lt.s32.totalorder %s15, 4
    // Predicated region
    $region41: #{tpu_custom_call.1} parent=5 // pred_check
      %p277 = pneg %p276
    $region42: #{tpu_custom_call.1} parent=5 // pred_check_branch
      %279 = sbr.rel (%p277) target = $region44
    $region43: #{tpu_custom_call.1} parent=5 // pred_region
      // Predicated region
      $region45: #{tpu_custom_call.1} parent=43 // pred_check
        %p280 = pneg %p35
      $region46: #{tpu_custom_call.1} parent=43 // pred_check_branch
        %282 = sbr.rel (%p280) target = $region48
      $region47: #{tpu_custom_call.1} parent=43 // pred_region
        %s283 = smul.u32 32, %s15
        %p284 = scmp.lt.s32.totalorder %s283, 127
        %s285 = scalar_select %p284, %s283, 127
        %s286 = smul.addr %s285, 8
        %s287 = scalar_lea.vmem %s0, %s286
        %s288 = smul.u32 32, %s15
      $region48: #{tpu_custom_call.1} parent=43 // pred_fallthru
        _
      // Predicated region
      $region49: #{tpu_custom_call.1} parent=43 // pred_check
        %p289 = pneg %p61
      $region50: #{tpu_custom_call.1} parent=43 // pred_check_branch
        %291 = sbr.rel (%p289) target = $region52
      $region51: #{tpu_custom_call.1} parent=43 // pred_region
        %s292 = smul.u32 32, %s15
        %p293 = scmp.lt.s32.totalorder %s292, 127
        %s294 = scalar_select %p293, %s292, 127
        %s295 = smul.addr %s294, 8
        %s296 = scalar_lea.vmem %s1, %s295
        %s297 = smul.u32 32, %s15
      $region52: #{tpu_custom_call.1} parent=43 // pred_fallthru
        _
    $region44: #{tpu_custom_call.1} parent=5 // pred_fallthru
      _
    %p298 = scmp.le.s32.totalorder 1, %s15
    %p299 = scmp.lt.s32.totalorder %s15, 5
    %p300 = pnand %p298, %p299
    %p301 = pneg %p300
    // Predicated region
    $region53: #{tpu_custom_call.1} parent=5 // pred_check
      _
    $region54: #{tpu_custom_call.1} parent=5 // pred_check_branch
      %303 = sbr.rel (%p300) target = $region56
    $region55: #{tpu_custom_call.1} parent=5 // pred_region
      %s304 = ssub.s32 %s15, 1
      %s305 = smul.u32 32, %s20
      %p306 = scmp.lt.s32.totalorder %s305, 127
      %s307 = scalar_select %p306, %s305, 127
      %s308 = smul.addr %s307, 8
      %s309 = scalar_lea.vmem %s0, %s308
      %p310 = pneg %p41
      %p311 = pneg %p38
      %s312 = smul.u32 32, %s20
      %p313 = scmp.lt.s32.totalorder %s312, 127
      %s314 = scalar_select %p313, %s312, 127
      %s315 = smul.addr %s314, 8
      %s316 = scalar_lea.vmem %s1, %s315
      %p317 = pneg %p67
      %p318 = pneg %p64
      %p319 = pneg %p88
      %p320 = pneg %p85
      %p321 = pneg %p109
      %p322 = pneg %p106
      %p323 = pneg %p130
      %p324 = pneg %p127
      %p325 = pneg %p151
      %p326 = pneg %p148
      %p327 = pneg %p172
      %p328 = pneg %p169
      %p329 = pneg %p193
      %p330 = pneg %p190
      %p331 = pneg %p214
      %p332 = pneg %p211
      %p333 = pneg %p240
      %p334 = pneg %p237
      %s335 = smul.u32 32, %s20
      %p336 = scmp.lt.s32.totalorder %s335, 127
      %s337 = scalar_select %p336, %s335, 127
      %s338 = smul.addr %s337, 8
      %s339 = scalar_lea.vmem %s9, %s338
      %s340 = smul.u32 32, %s20
      %p341 = scmp.lt.s32.totalorder %s340, 127
      %s342 = scalar_select %p341, %s340, 127
      %s343 = smul.addr %s342, 8
      %s344 = scalar_lea.vmem %s0, %s343
      %s345 = smul.u32 32, %s20
      %s346 = smul.u32 32, %s20
      %p347 = scmp.lt.s32.totalorder %s346, 127
      %s348 = scalar_select %p347, %s346, 127
      %s349 = smul.addr %s348, 8
      %s350 = scalar_lea.vmem %s1, %s349
      %s351 = smul.u32 32, %s20
      %s352 = smul.u32 32, %s20
      %p353 = scmp.lt.s32.totalorder %s352, 127
      %s354 = scalar_select %p353, %s352, 127
      %s355 = smul.addr %s354, 8
      %s356 = scalar_lea.vmem %s9, %s355
      %s357 = smul.u32 32, %s20
      %v359 = vld [vmem:[%s344] sm:$0xff]
      %v360 = vld [vmem:[%s344 + $0x8] sm:$0xff]
      %v361 = vld [vmem:[%s344 + $0x10] sm:$0xff]
      %v362 = vld [vmem:[%s344 + $0x18] sm:$0xff]
      %v363 = vld [vmem:[%s344 + $0x20] sm:$0xff]
      %v364 = vld [vmem:[%s344 + $0x28] sm:$0xff]
      %v365 = vld [vmem:[%s344 + $0x30] sm:$0xff]
      %v366 = vld [vmem:[%s344 + $0x38] sm:$0xff]
      %v367 = vld [vmem:[%s344 + $0x40] sm:$0xff]
      %v368 = vld [vmem:[%s344 + $0x48] sm:$0xff]
      %v369 = vld [vmem:[%s344 + $0x50] sm:$0xff]
      %v370 = vld [vmem:[%s344 + $0x58] sm:$0xff]
      %v371 = vld [vmem:[%s344 + $0x60] sm:$0xff]
      %v372 = vld [vmem:[%s344 + $0x68] sm:$0xff]
      %v373 = vld [vmem:[%s344 + $0x70] sm:$0xff]
      %v374 = vld [vmem:[%s344 + $0x78] sm:$0xff]
      %v375 = vld [vmem:[%s344 + $0x80] sm:$0xff]
      %v376 = vld [vmem:[%s344 + $0x88] sm:$0xff]
      %v377 = vld [vmem:[%s344 + $0x90] sm:$0xff]
      %v378 = vld [vmem:[%s344 + $0x98] sm:$0xff]
      %v379 = vld [vmem:[%s344 + $0xa0] sm:$0xff]
      %v380 = vld [vmem:[%s344 + $0xa8] sm:$0xff]
      %v381 = vld [vmem:[%s344 + $0xb0] sm:$0xff]
      %v382 = vld [vmem:[%s344 + $0xb8] sm:$0xff]
      %v383 = vld [vmem:[%s344 + $0xc0] sm:$0xff]
      %v384 = vld [vmem:[%s344 + $0xc8] sm:$0xff]
      %v385 = vld [vmem:[%s344 + $0xd0] sm:$0xff]
      %v386 = vld [vmem:[%s344 + $0xd8] sm:$0xff]
      %v387 = vld [vmem:[%s344 + $0xe0] sm:$0xff]
      %v388 = vld [vmem:[%s344 + $0xe8] sm:$0xff]
      %v389 = vld [vmem:[%s344 + $0xf0] sm:$0xff]
      %v390 = vld [vmem:[%s344 + $0xf8] sm:$0xff]
      %v391 = vpack.c.bf16 %v360, %v359
      %v392 = vpack.c.bf16 %v362, %v361
      %v393 = vpack.c.bf16 %v364, %v363
      %v394 = vpack.c.bf16 %v366, %v365
      %v395 = vpack.c.bf16 %v368, %v367
      %v396 = vpack.c.bf16 %v370, %v369
      %v397 = vpack.c.bf16 %v372, %v371
      %v398 = vpack.c.bf16 %v374, %v373
      %v399 = vpack.c.bf16 %v376, %v375
      %v400 = vpack.c.bf16 %v378, %v377
      %v401 = vpack.c.bf16 %v380, %v379
      %v402 = vpack.c.bf16 %v382, %v381
      %v403 = vpack.c.bf16 %v384, %v383
      %v404 = vpack.c.bf16 %v386, %v385
      %v405 = vpack.c.bf16 %v388, %v387
      %v406 = vpack.c.bf16 %v390, %v389
      %v407 = vld [vmem:[%s350] sm:$0xff]
      %v408 = vld [vmem:[%s350 + $0x8] sm:$0xff]
      %v409 = vld [vmem:[%s350 + $0x10] sm:$0xff]
      %v410 = vld [vmem:[%s350 + $0x18] sm:$0xff]
      %v411 = vld [vmem:[%s350 + $0x20] sm:$0xff]
      %v412 = vld [vmem:[%s350 + $0x28] sm:$0xff]
      %v413 = vld [vmem:[%s350 + $0x30] sm:$0xff]
      %v414 = vld [vmem:[%s350 + $0x38] sm:$0xff]
      %v415 = vld [vmem:[%s350 + $0x40] sm:$0xff]
      %v416 = vld [vmem:[%s350 + $0x48] sm:$0xff]
      %v417 = vld [vmem:[%s350 + $0x50] sm:$0xff]
      %v418 = vld [vmem:[%s350 + $0x58] sm:$0xff]
      %v419 = vld [vmem:[%s350 + $0x60] sm:$0xff]
      %v420 = vld [vmem:[%s350 + $0x68] sm:$0xff]
      %v421 = vld [vmem:[%s350 + $0x70] sm:$0xff]
      %v422 = vld [vmem:[%s350 + $0x78] sm:$0xff]
      %v423 = vld [vmem:[%s350 + $0x80] sm:$0xff]
      %v424 = vld [vmem:[%s350 + $0x88] sm:$0xff]
      %v425 = vld [vmem:[%s350 + $0x90] sm:$0xff]
      %v426 = vld [vmem:[%s350 + $0x98] sm:$0xff]
      %v427 = vld [vmem:[%s350 + $0xa0] sm:$0xff]
      %v428 = vld [vmem:[%s350 + $0xa8] sm:$0xff]
      %v429 = vld [vmem:[%s350 + $0xb0] sm:$0xff]
      %v430 = vld [vmem:[%s350 + $0xb8] sm:$0xff]
      %v431 = vld [vmem:[%s350 + $0xc0] sm:$0xff]
      %v432 = vld [vmem:[%s350 + $0xc8] sm:$0xff]
      %v433 = vld [vmem:[%s350 + $0xd0] sm:$0xff]
      %v434 = vld [vmem:[%s350 + $0xd8] sm:$0xff]
      %v435 = vld [vmem:[%s350 + $0xe0] sm:$0xff]
      %v436 = vld [vmem:[%s350 + $0xe8] sm:$0xff]
      %v437 = vld [vmem:[%s350 + $0xf0] sm:$0xff]
      %v438 = vld [vmem:[%s350 + $0xf8] sm:$0xff]
      %v439 = vpack.c.bf16 %v408, %v407
      %v440 = vpack.c.bf16 %v410, %v409
      %v441 = vpack.c.bf16 %v412, %v411
      %v442 = vpack.c.bf16 %v414, %v413
      %v443 = vpack.c.bf16 %v416, %v415
      %v444 = vpack.c.bf16 %v418, %v417
      %v445 = vpack.c.bf16 %v420, %v419
      %v446 = vpack.c.bf16 %v422, %v421
      %v447 = vpack.c.bf16 %v424, %v423
      %v448 = vpack.c.bf16 %v426, %v425
      %v449 = vpack.c.bf16 %v428, %v427
      %v450 = vpack.c.bf16 %v430, %v429
      %v451 = vpack.c.bf16 %v432, %v431
      %v452 = vpack.c.bf16 %v434, %v433
      %v453 = vpack.c.bf16 %v436, %v435
      %v454 = vpack.c.bf16 %v438, %v437
      %v455 = vld [vmem:[%s2] sm:$0xf]
      %v456 = vld [vmem:[%s2 + $0x4] sm:$0xf]
      %v457 = vld [vmem:[%s2 + $0x8] sm:$0xf]
      %v458 = vld [vmem:[%s2 + $0xc] sm:$0xf]
      %v459 = vld [vmem:[%s2 + $0x10] sm:$0xf]
      %v460 = vld [vmem:[%s2 + $0x14] sm:$0xf]
      %v461 = vld [vmem:[%s2 + $0x18] sm:$0xf]
      %v462 = vld [vmem:[%s2 + $0x1c] sm:$0x1]
      %v463 = vld [vmem:[%s3] sm:$0x7]
      %vm464 = vcmask 48128
      %v466 = vsel %vm464, %v439, 0
      %v469 = vsel %vm464, %v440, 0
      %v472 = vsel %vm464, %v441, 0
      %v475 = vsel %vm464, %v442, 0
      %v478 = vsel %vm464, %v443, 0
      %v481 = vsel %vm464, %v444, 0
      %v484 = vsel %vm464, %v445, 0
      %v487 = vsel %vm464, %v446, 0
      %v490 = vsel %vm464, %v447, 0
      %v493 = vsel %vm464, %v448, 0
      %v496 = vsel %vm464, %v449, 0
      %v499 = vsel %vm464, %v450, 0
      %v502 = vsel %vm464, %v451, 0
      %v505 = vsel %vm464, %v452, 0
      %v508 = vsel %vm464, %v453, 0
      %v511 = vsel %vm464, %v454, 0
      %vm513 = vcmask 1042432
      %v515 = vsel %vm513, %v463, 0
      %517 = vmatprep.subr.bf16.mxu0 0
      %518 = vmatpush1.bf16.msra.mxu0 %v515
      %519 = vmatprep.subr.bf16.mxu0 0
      %520 = vmatpush1.bf16.msra.mxu0 0
      %521 = vmatprep.subr.bf16.mxu0 0
      %522 = vmatpush1.bf16.msra.mxu0 0
      %523 = vmatprep.subr.bf16.mxu0 0
      %524 = vmatpush1.bf16.msra.mxu0 0
      %525 = vmatprep.subr.bf16.mxu0 0
      %526 = vmatpush1.bf16.msra.mxu0 0
      %527 = vmatprep.subr.bf16.mxu0 0
      %528 = vmatpush1.bf16.msra.mxu0 0
      %529 = vmatprep.subr.bf16.mxu0 0
      %530 = vmatpush1.bf16.msra.mxu0 0
      %531 = vmatprep.subr.bf16.mxu0 0
      %532 = vmatpush1.bf16.msra.mxu0 0
      %533 = vmatprep.subr.bf16.mxu0 0
      %534 = vmatpush1.bf16.msra.mxu0 0
      %535 = vmatprep.subr.bf16.mxu0 0
      %536 = vmatpush1.bf16.msra.mxu0 0
      %537 = vmatprep.subr.bf16.mxu0 0
      %538 = vmatpush1.bf16.msra.mxu0 0
      %539 = vmatprep.subr.bf16.mxu0 0
      %540 = vmatpush1.bf16.msra.mxu0 0
      %541 = vmatprep.subr.bf16.mxu0 0
      %542 = vmatpush1.bf16.msra.mxu0 0
      %543 = vmatprep.subr.bf16.mxu0 0
      %544 = vmatpush1.bf16.msra.mxu0 0
      %545 = vmatprep.subr.bf16.mxu0 0
      %546 = vmatpush1.bf16.msra.mxu0 0
      %547 = vmatprep.subr.bf16.mxu0 0
      %548 = vmatpush1.bf16.msra.mxu0 0
      %549 = vmatprep.mubr.bf16.mxu0 0
      %550 = vmatmul.mubr.bf16.gmra.mrb[0].mxu0 %v466
      %v551 = vpop.f32.mrb[0].mxu0
      %v552 = vadd.f32 0.0, %v551
      %v553 = vpop.f32.mrb[0].mxu0
      %v554 = vpop.f32.mrb[0].mxu0
      %v555 = vadd.f32 0.0, %v554
      %v556 = vpop.f32.mrb[0].mxu0
      %557 = vmatprep.mubr.bf16.mxu0 0
      %558 = vmatmul.mubr.bf16.gmra.mrb[0].mxu0 %v469
      %v559 = vpop.f32.mrb[0].mxu0
      %v560 = vadd.f32 0.0, %v559
      %v561 = vpop.f32.mrb[0].mxu0
      %v562 = vpop.f32.mrb[0].mxu0
      %v563 = vadd.f32 0.0, %v562
      %v564 = vpop.f32.mrb[0].mxu0
      %565 = vmatprep.mubr.bf16.mxu0 0
      %566 = vmatmul.mubr.bf16.gmra.mrb[0].mxu0 %v472
      %v567 = vpop.f32.mrb[0].mxu0
      %v568 = vadd.f32 0.0, %v567
      %v569 = vpop.f32.mrb[0].mxu0
      %v570 = vpop.f32.mrb[0].mxu0
      %v571 = vadd.f32 0.0, %v570
      %v572 = vpop.f32.mrb[0].mxu0
      %573 = vmatprep.mubr.bf16.mxu0 0
      %574 = vmatmul.mubr.bf16.gmra.mrb[0].mxu0 %v475
      %v575 = vpop.f32.mrb[0].mxu0
      %v576 = vadd.f32 0.0, %v575
      %v577 = vpop.f32.mrb[0].mxu0
      %v578 = vpop.f32.mrb[0].mxu0
      %v579 = vadd.f32 0.0, %v578
      %v580 = vpop.f32.mrb[0].mxu0
      %581 = vmatprep.mubr.bf16.mxu0 0
      %582 = vmatmul.mubr.bf16.gmra.mrb[0].mxu0 %v478
      %v583 = vpop.f32.mrb[0].mxu0
      %v584 = vadd.f32 0.0, %v583
      %v585 = vpop.f32.mrb[0].mxu0
      %v586 = vpop.f32.mrb[0].mxu0
      %v587 = vadd.f32 0.0, %v586
      %v588 = vpop.f32.mrb[0].mxu0
      %589 = vmatprep.mubr.bf16.mxu0 0
      %590 = vmatmul.mubr.bf16.gmra.mrb[0].mxu0 %v481
      %v591 = vpop.f32.mrb[0].mxu0
      %v592 = vadd.f32 0.0, %v591
      %v593 = vpop.f32.mrb[0].mxu0
      %v594 = vpop.f32.mrb[0].mxu0
      %v595 = vadd.f32 0.0, %v594
      %v596 = vpop.f32.mrb[0].mxu0
      %597 = vmatprep.mubr.bf16.mxu0 0
      %598 = vmatmul.mubr.bf16.gmra.mrb[0].mxu0 %v484
      %v599 = vpop.f32.mrb[0].mxu0
      %v600 = vadd.f32 0.0, %v599
      %v601 = vpop.f32.mrb[0].mxu0
      %v602 = vpop.f32.mrb[0].mxu0
      %v603 = vadd.f32 0.0, %v602
      %v604 = vpop.f32.mrb[0].mxu0
      %605 = vmatprep.mubr.bf16.mxu0 0
      %606 = vmatmul.mubr.bf16.gmra.mrb[0].mxu0 %v487
      %v607 = vpop.f32.mrb[0].mxu0
      %v608 = vadd.f32 0.0, %v607
      %v609 = vpop.f32.mrb[0].mxu0
      %v610 = vpop.f32.mrb[0].mxu0
      %v611 = vadd.f32 0.0, %v610
      %v612 = vpop.f32.mrb[0].mxu0
      %613 = vmatprep.mubr.bf16.mxu0 0
      %614 = vmatmul.mubr.bf16.gmra.mrb[0].mxu0 %v490
      %v615 = vpop.f32.mrb[0].mxu0
      %v616 = vadd.f32 0.0, %v615
      %v617 = vpop.f32.mrb[0].mxu0
      %v618 = vpop.f32.mrb[0].mxu0
      %v619 = vadd.f32 0.0, %v618
      %v620 = vpop.f32.mrb[0].mxu0
      %621 = vmatprep.mubr.bf16.mxu0 0
      %622 = vmatmul.mubr.bf16.gmra.mrb[0].mxu0 %v493
      %v623 = vpop.f32.mrb[0].mxu0
      %v624 = vadd.f32 0.0, %v623
      %v625 = vpop.f32.mrb[0].mxu0
      %v626 = vpop.f32.mrb[0].mxu0
      %v627 = vadd.f32 0.0, %v626
      %v628 = vpop.f32.mrb[0].mxu0
      %629 = vmatprep.mubr.bf16.mxu0 0
      %630 = vmatmul.mubr.bf16.gmra.mrb[0].mxu0 %v496
      %v631 = vpop.f32.mrb[0].mxu0
      %v632 = vadd.f32 0.0, %v631
      %v633 = vpop.f32.mrb[0].mxu0
      %v634 = vpop.f32.mrb[0].mxu0
      %v635 = vadd.f32 0.0, %v634
      %v636 = vpop.f32.mrb[0].mxu0
      %637 = vmatprep.mubr.bf16.mxu0 0
      %638 = vmatmul.mubr.bf16.gmra.mrb[0].mxu0 %v499
      %v639 = vpop.f32.mrb[0].mxu0
      %v640 = vadd.f32 0.0, %v639
      %v641 = vpop.f32.mrb[0].mxu0
      %v642 = vpop.f32.mrb[0].mxu0
      %v643 = vadd.f32 0.0, %v642
      %v644 = vpop.f32.mrb[0].mxu0
      %645 = vmatprep.mubr.bf16.mxu0 0
      %646 = vmatmul.mubr.bf16.gmra.mrb[0].mxu0 %v502
      %v647 = vpop.f32.mrb[0].mxu0
      %v648 = vadd.f32 0.0, %v647
      %v649 = vpop.f32.mrb[0].mxu0
      %v650 = vpop.f32.mrb[0].mxu0
      %v651 = vadd.f32 0.0, %v650
      %v652 = vpop.f32.mrb[0].mxu0
      %653 = vmatprep.mubr.bf16.mxu0 0
      %654 = vmatmul.mubr.bf16.gmra.mrb[0].mxu0 %v505
      %v655 = vpop.f32.mrb[0].mxu0
      %v656 = vadd.f32 0.0, %v655
      %v657 = vpop.f32.mrb[0].mxu0
      %v658 = vpop.f32.mrb[0].mxu0
      %v659 = vadd.f32 0.0, %v658
      %v660 = vpop.f32.mrb[0].mxu0
      %661 = vmatprep.mubr.bf16.mxu0 0
      %662 = vmatmul.mubr.bf16.gmra.mrb[0].mxu0 %v508
      %v663 = vpop.f32.mrb[0].mxu0
      %v664 = vadd.f32 0.0, %v663
      %v665 = vpop.f32.mrb[0].mxu0
      %v666 = vpop.f32.mrb[0].mxu0
      %v667 = vadd.f32 0.0, %v666
      %v668 = vpop.f32.mrb[0].mxu0
      %669 = vmatprep.mubr.bf16.mxu0 0
      %670 = vmatmul.mubr.bf16.gmra.mrb[0].mxu0 %v511
      %v671 = vpop.f32.mrb[0].mxu0
      %v672 = vadd.f32 0.0, %v671
      %v673 = vpop.f32.mrb[0].mxu0
      %v674 = vpop.f32.mrb[0].mxu0
      %v675 = vadd.f32 0.0, %v674
      %v676 = vpop.f32.mrb[0].mxu0
      %677 = vdwg.mxu0
      %v686 = vunpack.c.l.b16 %v455
      %v687 = vunpack.c.l.b16 %v456
      %v688 = vunpack.c.l.b16 %v457
      %v689 = vunpack.c.l.b16 %v458
      %v690 = vunpack.c.l.b16 %v459
      %v691 = vunpack.c.l.b16 %v460
      %v692 = vunpack.c.l.b16 %v461
      %v693 = vunpack.c.l.b16 %v462
      %v694 = vpack.c.b16 %v687, %v686
      %v695 = vpack.c.b16 %v689, %v688
      %v696 = vpack.c.b16 %v691, %v690
      %v697 = vpack.c.b16 %v693, %v692
      %vm701 = vcmask 474112
      %v703 = vsel %vm701, %v391, 0
      %v706 = vsel %vm701, %v392, 0
      %v709 = vsel %vm701, %v393, 0
      %v712 = vsel %vm701, %v394, 0
      %v715 = vsel %vm701, %v395, 0
      %v718 = vsel %vm701, %v396, 0
      %v721 = vsel %vm701, %v397, 0
      %v724 = vsel %vm701, %v398, 0
      %v727 = vsel %vm701, %v399, 0
      %v730 = vsel %vm701, %v400, 0
      %v733 = vsel %vm701, %v401, 0
      %v736 = vsel %vm701, %v402, 0
      %v739 = vsel %vm701, %v403, 0
      %v742 = vsel %vm701, %v404, 0
      %v745 = vsel %vm701, %v405, 0
      %v748 = vsel %vm701, %v406, 0
      %vm750 = vcmask 1044480
      %v752 = vsel %vm750, %v697, 0
      %754 = vmatprep.subr.bf16.mxu0 0
      %755 = vmatpush1.bf16.msra.mxu0 %v694
      %756 = vmatprep.subr.bf16.mxu0 0
      %757 = vmatpush1.bf16.msra.mxu0 %v695
      %758 = vmatprep.subr.bf16.mxu0 0
      %759 = vmatpush1.bf16.msra.mxu0 %v696
      %760 = vmatprep.subr.bf16.mxu0 0
      %761 = vmatpush1.bf16.msra.mxu0 %v752
      %762 = vmatprep.subr.bf16.mxu0 0
      %763 = vmatpush1.bf16.msra.mxu0 0
      %764 = vmatprep.subr.bf16.mxu0 0
      %765 = vmatpush1.bf16.msra.mxu0 0
      %766 = vmatprep.subr.bf16.mxu0 0
      %767 = vmatpush1.bf16.msra.mxu0 0
      %768 = vmatprep.subr.bf16.mxu0 0
      %769 = vmatpush1.bf16.msra.mxu0 0
      %770 = vmatprep.subr.bf16.mxu0 0
      %771 = vmatpush1.bf16.msra.mxu0 0
      %772 = vmatprep.subr.bf16.mxu0 0
      %773 = vmatpush1.bf16.msra.mxu0 0
      %774 = vmatprep.subr.bf16.mxu0 0
      %775 = vmatpush1.bf16.msra.mxu0 0
      %776 = vmatprep.subr.bf16.mxu0 0
      %777 = vmatpush1.bf16.msra.mxu0 0
      %778 = vmatprep.subr.bf16.mxu0 0
      %779 = vmatpush1.bf16.msra.mxu0 0
      %780 = vmatprep.subr.bf16.mxu0 0
      %781 = vmatpush1.bf16.msra.mxu0 0
      %782 = vmatprep.subr.bf16.mxu0 0
      %783 = vmatpush1.bf16.msra.mxu0 0
      %784 = vmatprep.subr.bf16.mxu0 0
      %785 = vmatpush1.bf16.msra.mxu0 0
      %786 = vmatprep.mubr.bf16.mxu0 0
      %787 = vmatmul.mubr.bf16.gmra.mrb[0].mxu0 %v703
      %v788 = vpop.f32.mrb[0].mxu0
      %v789 = vadd.f32 %v552, %v788
      %v790 = vpop.f32.mrb[0].mxu0
      %v791 = vpop.f32.mrb[0].mxu0
      %v792 = vadd.f32 %v555, %v791
      %v793 = vpop.f32.mrb[0].mxu0
      %794 = vmatprep.mubr.bf16.mxu0 0
      %795 = vmatmul.mubr.bf16.gmra.mrb[0].mxu0 %v706
      %v796 = vpop.f32.mrb[0].mxu0
      %v797 = vadd.f32 %v560, %v796
      %v798 = vpop.f32.mrb[0].mxu0
      %v799 = vpop.f32.mrb[0].mxu0
      %v800 = vadd.f32 %v563, %v799
      %v801 = vpop.f32.mrb[0].mxu0
      %802 = vmatprep.mubr.bf16.mxu0 0
      %803 = vmatmul.mubr.bf16.gmra.mrb[0].mxu0 %v709
      %v804 = vpop.f32.mrb[0].mxu0
      %v805 = vadd.f32 %v568, %v804
      %v806 = vpop.f32.mrb[0].mxu0
      %v807 = vpop.f32.mrb[0].mxu0
      %v808 = vadd.f32 %v571, %v807
      %v809 = vpop.f32.mrb[0].mxu0
      %810 = vmatprep.mubr.bf16.mxu0 0
      %811 = vmatmul.mubr.bf16.gmra.mrb[0].mxu0 %v712
      %v812 = vpop.f32.mrb[0].mxu0
      %v813 = vadd.f32 %v576, %v812
      %v814 = vpop.f32.mrb[0].mxu0
      %v815 = vpop.f32.mrb[0].mxu0
      %v816 = vadd.f32 %v579, %v815
      %v817 = vpop.f32.mrb[0].mxu0
      %818 = vmatprep.mubr.bf16.mxu0 0
      %819 = vmatmul.mubr.bf16.gmra.mrb[0].mxu0 %v715
      %v820 = vpop.f32.mrb[0].mxu0
      %v821 = vadd.f32 %v584, %v820
      %v822 = vpop.f32.mrb[0].mxu0
      %v823 = vpop.f32.mrb[0].mxu0
      %v824 = vadd.f32 %v587, %v823
      %v825 = vpop.f32.mrb[0].mxu0
      %826 = vmatprep.mubr.bf16.mxu0 0
      %827 = vmatmul.mubr.bf16.gmra.mrb[0].mxu0 %v718
      %v828 = vpop.f32.mrb[0].mxu0
      %v829 = vadd.f32 %v592, %v828
      %v830 = vpop.f32.mrb[0].mxu0
      %v831 = vpop.f32.mrb[0].mxu0
      %v832 = vadd.f32 %v595, %v831
      %v833 = vpop.f32.mrb[0].mxu0
      %834 = vmatprep.mubr.bf16.mxu0 0
      %835 = vmatmul.mubr.bf16.gmra.mrb[0].mxu0 %v721
      %v836 = vpop.f32.mrb[0].mxu0
      %v837 = vadd.f32 %v600, %v836
      %v838 = vpop.f32.mrb[0].mxu0
      %v839 = vpop.f32.mrb[0].mxu0
      %v840 = vadd.f32 %v603, %v839
      %v841 = vpop.f32.mrb[0].mxu0
      %842 = vmatprep.mubr.bf16.mxu0 0
      %843 = vmatmul.mubr.bf16.gmra.mrb[0].mxu0 %v724
      %v844 = vpop.f32.mrb[0].mxu0
      %v845 = vadd.f32 %v608, %v844
      %v846 = vpop.f32.mrb[0].mxu0
      %v847 = vpop.f32.mrb[0].mxu0
      %v848 = vadd.f32 %v611, %v847
      %v849 = vpop.f32.mrb[0].mxu0
      %850 = vmatprep.mubr.bf16.mxu0 0
      %851 = vmatmul.mubr.bf16.gmra.mrb[0].mxu0 %v727
      %v852 = vpop.f32.mrb[0].mxu0
      %v853 = vadd.f32 %v616, %v852
      %v854 = vpop.f32.mrb[0].mxu0
      %v855 = vpop.f32.mrb[0].mxu0
      %v856 = vadd.f32 %v619, %v855
      %v857 = vpop.f32.mrb[0].mxu0
      %858 = vmatprep.mubr.bf16.mxu0 0
      %859 = vmatmul.mubr.bf16.gmra.mrb[0].mxu0 %v730
      %v860 = vpop.f32.mrb[0].mxu0
      %v861 = vadd.f32 %v624, %v860
      %v862 = vpop.f32.mrb[0].mxu0
      %v863 = vpop.f32.mrb[0].mxu0
      %v864 = vadd.f32 %v627, %v863
      %v865 = vpop.f32.mrb[0].mxu0
      %866 = vmatprep.mubr.bf16.mxu0 0
      %867 = vmatmul.mubr.bf16.gmra.mrb[0].mxu0 %v733
      %v868 = vpop.f32.mrb[0].mxu0
      %v869 = vadd.f32 %v632, %v868
      %v870 = vpop.f32.mrb[0].mxu0
      %v871 = vpop.f32.mrb[0].mxu0
      %v872 = vadd.f32 %v635, %v871
      %v873 = vpop.f32.mrb[0].mxu0
      %874 = vmatprep.mubr.bf16.mxu0 0
      %875 = vmatmul.mubr.bf16.gmra.mrb[0].mxu0 %v736
      %v876 = vpop.f32.mrb[0].mxu0
      %v877 = vadd.f32 %v640, %v876
      %v878 = vpop.f32.mrb[0].mxu0
      %v879 = vpop.f32.mrb[0].mxu0
      %v880 = vadd.f32 %v643, %v879
      %v881 = vpop.f32.mrb[0].mxu0
      %882 = vmatprep.mubr.bf16.mxu0 0
      %883 = vmatmul.mubr.bf16.gmra.mrb[0].mxu0 %v739
      %v884 = vpop.f32.mrb[0].mxu0
      %v885 = vadd.f32 %v648, %v884
      %v886 = vpop.f32.mrb[0].mxu0
      %v887 = vpop.f32.mrb[0].mxu0
      %v888 = vadd.f32 %v651, %v887
      %v889 = vpop.f32.mrb[0].mxu0
      %890 = vmatprep.mubr.bf16.mxu0 0
      %891 = vmatmul.mubr.bf16.gmra.mrb[0].mxu0 %v742
      %v892 = vpop.f32.mrb[0].mxu0
      %v893 = vadd.f32 %v656, %v892
      %v894 = vpop.f32.mrb[0].mxu0
      %v895 = vpop.f32.mrb[0].mxu0
      %v896 = vadd.f32 %v659, %v895
      %v897 = vpop.f32.mrb[0].mxu0
      %898 = vmatprep.mubr.bf16.mxu0 0
      %899 = vmatmul.mubr.bf16.gmra.mrb[0].mxu0 %v745
      %v900 = vpop.f32.mrb[0].mxu0
      %v901 = vadd.f32 %v664, %v900
      %v902 = vpop.f32.mrb[0].mxu0
      %v903 = vpop.f32.mrb[0].mxu0
      %v904 = vadd.f32 %v667, %v903
      %v905 = vpop.f32.mrb[0].mxu0
      %906 = vmatprep.mubr.bf16.mxu0 0
      %907 = vmatmul.mubr.bf16.gmra.mrb[0].mxu0 %v748
      %v908 = vpop.f32.mrb[0].mxu0
      %v909 = vadd.f32 %v672, %v908
      %v910 = vpop.f32.mrb[0].mxu0
      %v911 = vpop.f32.mrb[0].mxu0
      %v912 = vadd.f32 %v675, %v911
      %v913 = vpop.f32.mrb[0].mxu0
      %914 = vdwg.mxu0
      %v915 = vld [vmem:[%s4] sm:$0x1]
      %v917 = vlaneseq
      %v918 = vshrl.u32 %v917, 7
      %v919 = vsub.s32 0, %v918
      %v920 = vrot.slane %v915, %v919
      %v922 = vadd.f32 %v789, %v920
      %v923 = vadd.f32 %v792, %v920
      %v924 = vadd.f32 %v797, %v920
      %v925 = vadd.f32 %v800, %v920
      %v926 = vadd.f32 %v805, %v920
      %v927 = vadd.f32 %v808, %v920
      %v928 = vadd.f32 %v813, %v920
      %v929 = vadd.f32 %v816, %v920
      %v930 = vadd.f32 %v821, %v920
      %v931 = vadd.f32 %v824, %v920
      %v932 = vadd.f32 %v829, %v920
      %v933 = vadd.f32 %v832, %v920
      %v934 = vadd.f32 %v837, %v920
      %v935 = vadd.f32 %v840, %v920
      %v936 = vadd.f32 %v845, %v920
      %v937 = vadd.f32 %v848, %v920
      %v938 = vadd.f32 %v853, %v920
      %v939 = vadd.f32 %v856, %v920
      %v940 = vadd.f32 %v861, %v920
      %v941 = vadd.f32 %v864, %v920
      %v942 = vadd.f32 %v869, %v920
      %v943 = vadd.f32 %v872, %v920
      %v944 = vadd.f32 %v877, %v920
      %v945 = vadd.f32 %v880, %v920
      %v946 = vadd.f32 %v885, %v920
      %v947 = vadd.f32 %v888, %v920
      %v948 = vadd.f32 %v893, %v920
      %v949 = vadd.f32 %v896, %v920
      %v950 = vadd.f32 %v901, %v920
      %v951 = vadd.f32 %v904, %v920
      %v952 = vadd.f32 %v909, %v920
      %v953 = vadd.f32 %v912, %v920
      %v954 = vmax.f32 %v922, 0.0
      %v955 = vmax.f32 %v923, 0.0
      %v956 = vmax.f32 %v924, 0.0
      %v957 = vmax.f32 %v925, 0.0
      %v958 = vmax.f32 %v926, 0.0
      %v959 = vmax.f32 %v927, 0.0
      %v960 = vmax.f32 %v928, 0.0
      %v961 = vmax.f32 %v929, 0.0
      %v962 = vmax.f32 %v930, 0.0
      %v963 = vmax.f32 %v931, 0.0
      %v964 = vmax.f32 %v932, 0.0
      %v965 = vmax.f32 %v933, 0.0
      %v966 = vmax.f32 %v934, 0.0
      %v967 = vmax.f32 %v935, 0.0
      %v968 = vmax.f32 %v936, 0.0
      %v969 = vmax.f32 %v937, 0.0
      %v970 = vmax.f32 %v938, 0.0
      %v971 = vmax.f32 %v939, 0.0
      %v972 = vmax.f32 %v940, 0.0
      %v973 = vmax.f32 %v941, 0.0
      %v974 = vmax.f32 %v942, 0.0
      %v975 = vmax.f32 %v943, 0.0
      %v976 = vmax.f32 %v944, 0.0
      %v977 = vmax.f32 %v945, 0.0
      %v978 = vmax.f32 %v946, 0.0
      %v979 = vmax.f32 %v947, 0.0
      %v980 = vmax.f32 %v948, 0.0
      %v981 = vmax.f32 %v949, 0.0
      %v982 = vmax.f32 %v950, 0.0
      %v983 = vmax.f32 %v951, 0.0
      %v984 = vmax.f32 %v952, 0.0
      %v985 = vmax.f32 %v953, 0.0
      %v986 = vpack.c.bf16 %v955, %v954
      %v987 = vpack.c.bf16 %v957, %v956
      %v988 = vpack.c.bf16 %v959, %v958
      %v989 = vpack.c.bf16 %v961, %v960
      %v990 = vpack.c.bf16 %v963, %v962
      %v991 = vpack.c.bf16 %v965, %v964
      %v992 = vpack.c.bf16 %v967, %v966
      %v993 = vpack.c.bf16 %v969, %v968
      %v994 = vpack.c.bf16 %v971, %v970
      %v995 = vpack.c.bf16 %v973, %v972
      %v996 = vpack.c.bf16 %v975, %v974
      %v997 = vpack.c.bf16 %v977, %v976
      %v998 = vpack.c.bf16 %v979, %v978
      %v999 = vpack.c.bf16 %v981, %v980
      %v1000 = vpack.c.bf16 %v983, %v982
      %v1001 = vpack.c.bf16 %v985, %v984
      %v1002 = vld [vmem:[%s5] sm:$0xf]
      %v1003 = vld [vmem:[%s5 + $0x4] sm:$0xf]
      %v1004 = vld [vmem:[%s5 + $0x8] sm:$0xf]
      %v1005 = vld [vmem:[%s5 + $0xc] sm:$0xf]
      %v1006 = vld [vmem:[%s5 + $0x10] sm:$0xf]
      %v1007 = vld [vmem:[%s5 + $0x14] sm:$0xf]
      %v1008 = vld [vmem:[%s5 + $0x18] sm:$0xf]
      %v1009 = vld [vmem:[%s5 + $0x1c] sm:$0xf]
      %v1010 = vld [vmem:[%s5 + $0x20] sm:$0xf]
      %v1011 = vld [vmem:[%s5 + $0x24] sm:$0xf]
      %v1012 = vld [vmem:[%s5 + $0x28] sm:$0xf]
      %v1013 = vld [vmem:[%s5 + $0x2c] sm:$0xf]
      %v1014 = vld [vmem:[%s5 + $0x30] sm:$0xf]
      %v1015 = vld [vmem:[%s5 + $0x34] sm:$0xf]
      %v1016 = vld [vmem:[%s5 + $0x38] sm:$0xf]
      %v1017 = vld [vmem:[%s5 + $0x3c] sm:$0xf]
      %v1018 = vld [vmem:[%s6] sm:$0x1]
      %v1020 = vlaneseq
      %v1021 = vshrl.u32 %v1020, 7
      %v1022 = vsub.s32 0, %v1021
      %v1023 = vrot.slane %v1018, %v1022
      %v1041 = vunpack.c.l.b16 %v1002
      %v1042 = vunpack.c.l.b16 %v1003
      %v1043 = vunpack.c.l.b16 %v1004
      %v1044 = vunpack.c.l.b16 %v1005
      %v1045 = vunpack.c.l.b16 %v1006
      %v1046 = vunpack.c.l.b16 %v1007
      %v1047 = vunpack.c.l.b16 %v1008
      %v1048 = vunpack.c.l.b16 %v1009
      %v1049 = vunpack.c.l.b16 %v1010
      %v1050 = vunpack.c.l.b16 %v1011
      %v1051 = vunpack.c.l.b16 %v1012
      %v1052 = vunpack.c.l.b16 %v1013
      %v1053 = vunpack.c.l.b16 %v1014
      %v1054 = vunpack.c.l.b16 %v1015
      %v1055 = vunpack.c.l.b16 %v1016
      %v1056 = vunpack.c.l.b16 %v1017
      %v1057 = vpack.c.b16 %v1042, %v1041
      %v1058 = vpack.c.b16 %v1044, %v1043
      %v1059 = vpack.c.b16 %v1046, %v1045
      %v1060 = vpack.c.b16 %v1048, %v1047
      %v1061 = vpack.c.b16 %v1050, %v1049
      %v1062 = vpack.c.b16 %v1052, %v1051
      %v1063 = vpack.c.b16 %v1054, %v1053
      %v1064 = vpack.c.b16 %v1056, %v1055
      %1073 = vmatprep.subr.bf16.mxu0 0
      %1074 = vmatpush1.bf16.msra.mxu0 %v1057
      %1075 = vmatprep.subr.bf16.mxu0 0
      %1076 = vmatpush1.bf16.msra.mxu0 %v1058
      %1077 = vmatprep.subr.bf16.mxu0 0
      %1078 = vmatpush1.bf16.msra.mxu0 %v1059
      %1079 = vmatprep.subr.bf16.mxu0 0
      %1080 = vmatpush1.bf16.msra.mxu0 %v1060
      %1081 = vmatprep.subr.bf16.mxu0 0
      %1082 = vmatpush1.bf16.msra.mxu0 %v1061
      %1083 = vmatprep.subr.bf16.mxu0 0
      %1084 = vmatpush1.bf16.msra.mxu0 %v1062
      %1085 = vmatprep.subr.bf16.mxu0 0
      %1086 = vmatpush1.bf16.msra.mxu0 %v1063
      %1087 = vmatprep.subr.bf16.mxu0 0
      %1088 = vmatpush1.bf16.msra.mxu0 %v1064
      %1089 = vmatprep.subr.bf16.mxu0 0
      %1090 = vmatpush1.bf16.msra.mxu0 0
      %1091 = vmatprep.subr.bf16.mxu0 0
      %1092 = vmatpush1.bf16.msra.mxu0 0
      %1093 = vmatprep.subr.bf16.mxu0 0
      %1094 = vmatpush1.bf16.msra.mxu0 0
      %1095 = vmatprep.subr.bf16.mxu0 0
      %1096 = vmatpush1.bf16.msra.mxu0 0
      %1097 = vmatprep.subr.bf16.mxu0 0
      %1098 = vmatpush1.bf16.msra.mxu0 0
      %1099 = vmatprep.subr.bf16.mxu0 0
      %1100 = vmatpush1.bf16.msra.mxu0 0
      %1101 = vmatprep.subr.bf16.mxu0 0
      %1102 = vmatpush1.bf16.msra.mxu0 0
      %1103 = vmatprep.subr.bf16.mxu0 0
      %1104 = vmatpush1.bf16.msra.mxu0 0
      %1105 = vmatprep.mubr.bf16.mxu0 0
      %1106 = vmatmul.mubr.bf16.gmra.mrb[0].mxu0 %v986
      %v1107 = vpop.f32.mrb[0].mxu0
      %v1108 = vadd.f32 %v1023, %v1107
      %v1109 = vpop.f32.mrb[0].mxu0
      %v1110 = vpop.f32.mrb[0].mxu0
      %v1111 = vadd.f32 %v1023, %v1110
      %v1112 = vpop.f32.mrb[0].mxu0
      %1113 = vmatprep.mubr.bf16.mxu0 0
      %1114 = vmatmul.mubr.bf16.gmra.mrb[0].mxu0 %v987
      %v1115 = vpop.f32.mrb[0].mxu0
      %v1116 = vadd.f32 %v1023, %v1115
      %v1117 = vpop.f32.mrb[0].mxu0
      %v1118 = vpop.f32.mrb[0].mxu0
      %v1119 = vadd.f32 %v1023, %v1118
      %v1120 = vpop.f32.mrb[0].mxu0
      %1121 = vmatprep.mubr.bf16.mxu0 0
      %1122 = vmatmul.mubr.bf16.gmra.mrb[0].mxu0 %v988
      %v1123 = vpop.f32.mrb[0].mxu0
      %v1124 = vadd.f32 %v1023, %v1123
      %v1125 = vpop.f32.mrb[0].mxu0
      %v1126 = vpop.f32.mrb[0].mxu0
      %v1127 = vadd.f32 %v1023, %v1126
      %v1128 = vpop.f32.mrb[0].mxu0
      %1129 = vmatprep.mubr.bf16.mxu0 0
      %1130 = vmatmul.mubr.bf16.gmra.mrb[0].mxu0 %v989
      %v1131 = vpop.f32.mrb[0].mxu0
      %v1132 = vadd.f32 %v1023, %v1131
      %v1133 = vpop.f32.mrb[0].mxu0
      %v1134 = vpop.f32.mrb[0].mxu0
      %v1135 = vadd.f32 %v1023, %v1134
      %v1136 = vpop.f32.mrb[0].mxu0
      %1137 = vmatprep.mubr.bf16.mxu0 0
      %1138 = vmatmul.mubr.bf16.gmra.mrb[0].mxu0 %v990
      %v1139 = vpop.f32.mrb[0].mxu0
      %v1140 = vadd.f32 %v1023, %v1139
      %v1141 = vpop.f32.mrb[0].mxu0
      %v1142 = vpop.f32.mrb[0].mxu0
      %v1143 = vadd.f32 %v1023, %v1142
      %v1144 = vpop.f32.mrb[0].mxu0
      %1145 = vmatprep.mubr.bf16.mxu0 0
      %1146 = vmatmul.mubr.bf16.gmra.mrb[0].mxu0 %v991
      %v1147 = vpop.f32.mrb[0].mxu0
      %v1148 = vadd.f32 %v1023, %v1147
      %v1149 = vpop.f32.mrb[0].mxu0
      %v1150 = vpop.f32.mrb[0].mxu0
      %v1151 = vadd.f32 %v1023, %v1150
      %v1152 = vpop.f32.mrb[0].mxu0
      %1153 = vmatprep.mubr.bf16.mxu0 0
      %1154 = vmatmul.mubr.bf16.gmra.mrb[0].mxu0 %v992
      %v1155 = vpop.f32.mrb[0].mxu0
      %v1156 = vadd.f32 %v1023, %v1155
      %v1157 = vpop.f32.mrb[0].mxu0
      %v1158 = vpop.f32.mrb[0].mxu0
      %v1159 = vadd.f32 %v1023, %v1158
      %v1160 = vpop.f32.mrb[0].mxu0
      %1161 = vmatprep.mubr.bf16.mxu0 0
      %1162 = vmatmul.mubr.bf16.gmra.mrb[0].mxu0 %v993
      %v1163 = vpop.f32.mrb[0].mxu0
      %v1164 = vadd.f32 %v1023, %v1163
      %v1165 = vpop.f32.mrb[0].mxu0
      %v1166 = vpop.f32.mrb[0].mxu0
      %v1167 = vadd.f32 %v1023, %v1166
      %v1168 = vpop.f32.mrb[0].mxu0
      %1169 = vmatprep.mubr.bf16.mxu0 0
      %1170 = vmatmul.mubr.bf16.gmra.mrb[0].mxu0 %v994
      %v1171 = vpop.f32.mrb[0].mxu0
      %v1172 = vadd.f32 %v1023, %v1171
      %v1173 = vpop.f32.mrb[0].mxu0
      %v1174 = vpop.f32.mrb[0].mxu0
      %v1175 = vadd.f32 %v1023, %v1174
      %v1176 = vpop.f32.mrb[0].mxu0
      %1177 = vmatprep.mubr.bf16.mxu0 0
      %1178 = vmatmul.mubr.bf16.gmra.mrb[0].mxu0 %v995
      %v1179 = vpop.f32.mrb[0].mxu0
      %v1180 = vadd.f32 %v1023, %v1179
      %v1181 = vpop.f32.mrb[0].mxu0
      %v1182 = vpop.f32.mrb[0].mxu0
      %v1183 = vadd.f32 %v1023, %v1182
      %v1184 = vpop.f32.mrb[0].mxu0
      %1185 = vmatprep.mubr.bf16.mxu0 0
      %1186 = vmatmul.mubr.bf16.gmra.mrb[0].mxu0 %v996
      %v1187 = vpop.f32.mrb[0].mxu0
      %v1188 = vadd.f32 %v1023, %v1187
      %v1189 = vpop.f32.mrb[0].mxu0
      %v1190 = vpop.f32.mrb[0].mxu0
      %v1191 = vadd.f32 %v1023, %v1190
      %v1192 = vpop.f32.mrb[0].mxu0
      %1193 = vmatprep.mubr.bf16.mxu0 0
      %1194 = vmatmul.mubr.bf16.gmra.mrb[0].mxu0 %v997
      %v1195 = vpop.f32.mrb[0].mxu0
      %v1196 = vadd.f32 %v1023, %v1195
      %v1197 = vpop.f32.mrb[0].mxu0
      %v1198 = vpop.f32.mrb[0].mxu0
      %v1199 = vadd.f32 %v1023, %v1198
      %v1200 = vpop.f32.mrb[0].mxu0
      %1201 = vmatprep.mubr.bf16.mxu0 0
      %1202 = vmatmul.mubr.bf16.gmra.mrb[0].mxu0 %v998
      %v1203 = vpop.f32.mrb[0].mxu0
      %v1204 = vadd.f32 %v1023, %v1203
      %v1205 = vpop.f32.mrb[0].mxu0
      %v1206 = vpop.f32.mrb[0].mxu0
      %v1207 = vadd.f32 %v1023, %v1206
      %v1208 = vpop.f32.mrb[0].mxu0
      %1209 = vmatprep.mubr.bf16.mxu0 0
      %1210 = vmatmul.mubr.bf16.gmra.mrb[0].mxu0 %v999
      %v1211 = vpop.f32.mrb[0].mxu0
      %v1212 = vadd.f32 %v1023, %v1211
      %v1213 = vpop.f32.mrb[0].mxu0
      %v1214 = vpop.f32.mrb[0].mxu0
      %v1215 = vadd.f32 %v1023, %v1214
      %v1216 = vpop.f32.mrb[0].mxu0
      %1217 = vmatprep.mubr.bf16.mxu0 0
      %1218 = vmatmul.mubr.bf16.gmra.mrb[0].mxu0 %v1000
      %v1219 = vpop.f32.mrb[0].mxu0
      %v1220 = vadd.f32 %v1023, %v1219
      %v1221 = vpop.f32.mrb[0].mxu0
      %v1222 = vpop.f32.mrb[0].mxu0
      %v1223 = vadd.f32 %v1023, %v1222
      %v1224 = vpop.f32.mrb[0].mxu0
      %1225 = vmatprep.mubr.bf16.mxu0 0
      %1226 = vmatmul.mubr.bf16.gmra.mrb[0].mxu0 %v1001
      %v1227 = vpop.f32.mrb[0].mxu0
      %v1228 = vadd.f32 %v1023, %v1227
      %v1229 = vpop.f32.mrb[0].mxu0
      %v1230 = vpop.f32.mrb[0].mxu0
      %v1231 = vadd.f32 %v1023, %v1230
      %v1232 = vpop.f32.mrb[0].mxu0
      %1233 = vdwg.mxu0
      %v1234 = vmax.f32 %v1108, 0.0
      %v1235 = vmax.f32 %v1111, 0.0
      %v1236 = vmax.f32 %v1116, 0.0
      %v1237 = vmax.f32 %v1119, 0.0
      %v1238 = vmax.f32 %v1124, 0.0
      %v1239 = vmax.f32 %v1127, 0.0
      %v1240 = vmax.f32 %v1132, 0.0
      %v1241 = vmax.f32 %v1135, 0.0
      %v1242 = vmax.f32 %v1140, 0.0
      %v1243 = vmax.f32 %v1143, 0.0
      %v1244 = vmax.f32 %v1148, 0.0
      %v1245 = vmax.f32 %v1151, 0.0
      %v1246 = vmax.f32 %v1156, 0.0
      %v1247 = vmax.f32 %v1159, 0.0
      %v1248 = vmax.f32 %v1164, 0.0
      %v1249 = vmax.f32 %v1167, 0.0
      %v1250 = vmax.f32 %v1172, 0.0
      %v1251 = vmax.f32 %v1175, 0.0
      %v1252 = vmax.f32 %v1180, 0.0
      %v1253 = vmax.f32 %v1183, 0.0
      %v1254 = vmax.f32 %v1188, 0.0
      %v1255 = vmax.f32 %v1191, 0.0
      %v1256 = vmax.f32 %v1196, 0.0
      %v1257 = vmax.f32 %v1199, 0.0
      %v1258 = vmax.f32 %v1204, 0.0
      %v1259 = vmax.f32 %v1207, 0.0
      %v1260 = vmax.f32 %v1212, 0.0
      %v1261 = vmax.f32 %v1215, 0.0
      %v1262 = vmax.f32 %v1220, 0.0
      %v1263 = vmax.f32 %v1223, 0.0
      %v1264 = vmax.f32 %v1228, 0.0
      %v1265 = vmax.f32 %v1231, 0.0
      %v1266 = vpack.c.bf16 %v1235, %v1234
      %v1267 = vpack.c.bf16 %v1237, %v1236
      %v1268 = vpack.c.bf16 %v1239, %v1238
      %v1269 = vpack.c.bf16 %v1241, %v1240
      %v1270 = vpack.c.bf16 %v1243, %v1242
      %v1271 = vpack.c.bf16 %v1245, %v1244
      %v1272 = vpack.c.bf16 %v1247, %v1246
      %v1273 = vpack.c.bf16 %v1249, %v1248
      %v1274 = vpack.c.bf16 %v1251, %v1250
      %v1275 = vpack.c.bf16 %v1253, %v1252
      %v1276 = vpack.c.bf16 %v1255, %v1254
      %v1277 = vpack.c.bf16 %v1257, %v1256
      %v1278 = vpack.c.bf16 %v1259, %v1258
      %v1279 = vpack.c.bf16 %v1261, %v1260
      %v1280 = vpack.c.bf16 %v1263, %v1262
      %v1281 = vpack.c.bf16 %v1265, %v1264
      %v1282 = vld [vmem:[%s7] sm:$0xf]
      %v1283 = vld [vmem:[%s7 + $0x4] sm:$0xf]
      %v1284 = vld [vmem:[%s7 + $0x8] sm:$0xf]
      %v1285 = vld [vmem:[%s7 + $0xc] sm:$0xf]
      %v1286 = vld [vmem:[%s7 + $0x10] sm:$0xf]
      %v1287 = vld [vmem:[%s7 + $0x14] sm:$0xf]
      %v1288 = vld [vmem:[%s7 + $0x18] sm:$0xf]
      %v1289 = vld [vmem:[%s7 + $0x1c] sm:$0xf]
      %v1290 = vld [vmem:[%s7 + $0x20] sm:$0xf]
      %v1291 = vld [vmem:[%s7 + $0x24] sm:$0xf]
      %v1292 = vld [vmem:[%s7 + $0x28] sm:$0xf]
      %v1293 = vld [vmem:[%s7 + $0x2c] sm:$0xf]
      %v1294 = vld [vmem:[%s7 + $0x30] sm:$0xf]
      %v1295 = vld [vmem:[%s7 + $0x34] sm:$0xf]
      %v1296 = vld [vmem:[%s7 + $0x38] sm:$0xf]
      %v1297 = vld [vmem:[%s7 + $0x3c] sm:$0xf]
      %v1298 = vld [vmem:[%s8] sm:$0x1]
      %v1300 = vlaneseq
      %v1301 = vshrl.u32 %v1300, 7
      %v1302 = vsub.s32 0, %v1301
      %v1303 = vrot.slane %v1298, %v1302
      %v1321 = vunpack.c.l.b16 %v1282
      %v1322 = vunpack.c.l.b16 %v1283
      %v1323 = vunpack.c.l.b16 %v1284
      %v1324 = vunpack.c.l.b16 %v1285
      %v1325 = vunpack.c.l.b16 %v1286
      %v1326 = vunpack.c.l.b16 %v1287
      %v1327 = vunpack.c.l.b16 %v1288
      %v1328 = vunpack.c.l.b16 %v1289
      %v1329 = vunpack.c.l.b16 %v1290
      %v1330 = vunpack.c.l.b16 %v1291
      %v1331 = vunpack.c.l.b16 %v1292
      %v1332 = vunpack.c.l.b16 %v1293
      %v1333 = vunpack.c.l.b16 %v1294
      %v1334 = vunpack.c.l.b16 %v1295
      %v1335 = vunpack.c.l.b16 %v1296
      %v1336 = vunpack.c.l.b16 %v1297
      %v1337 = vpack.c.b16 %v1322, %v1321
      %v1338 = vpack.c.b16 %v1324, %v1323
      %v1339 = vpack.c.b16 %v1326, %v1325
      %v1340 = vpack.c.b16 %v1328, %v1327
      %v1341 = vpack.c.b16 %v1330, %v1329
      %v1342 = vpack.c.b16 %v1332, %v1331
      %v1343 = vpack.c.b16 %v1334, %v1333
      %v1344 = vpack.c.b16 %v1336, %v1335
      %1353 = vmatprep.subr.bf16.mxu0 0
      %1354 = vmatpush1.bf16.msra.mxu0 %v1337
      %1355 = vmatprep.subr.bf16.mxu0 0
      %1356 = vmatpush1.bf16.msra.mxu0 %v1338
      %1357 = vmatprep.subr.bf16.mxu0 0
      %1358 = vmatpush1.bf16.msra.mxu0 %v1339
      %1359 = vmatprep.subr.bf16.mxu0 0
      %1360 = vmatpush1.bf16.msra.mxu0 %v1340
      %1361 = vmatprep.subr.bf16.mxu0 0
      %1362 = vmatpush1.bf16.msra.mxu0 %v1341
      %1363 = vmatprep.subr.bf16.mxu0 0
      %1364 = vmatpush1.bf16.msra.mxu0 %v1342
      %1365 = vmatprep.subr.bf16.mxu0 0
      %1366 = vmatpush1.bf16.msra.mxu0 %v1343
      %1367 = vmatprep.subr.bf16.mxu0 0
      %1368 = vmatpush1.bf16.msra.mxu0 %v1344
      %1369 = vmatprep.subr.bf16.mxu0 0
      %1370 = vmatpush1.bf16.msra.mxu0 0
      %1371 = vmatprep.subr.bf16.mxu0 0
      %1372 = vmatpush1.bf16.msra.mxu0 0
      %1373 = vmatprep.subr.bf16.mxu0 0
      %1374 = vmatpush1.bf16.msra.mxu0 0
      %1375 = vmatprep.subr.bf16.mxu0 0
      %1376 = vmatpush1.bf16.msra.mxu0 0
      %1377 = vmatprep.subr.bf16.mxu0 0
      %1378 = vmatpush1.bf16.msra.mxu0 0
      %1379 = vmatprep.subr.bf16.mxu0 0
      %1380 = vmatpush1.bf16.msra.mxu0 0
      %1381 = vmatprep.subr.bf16.mxu0 0
      %1382 = vmatpush1.bf16.msra.mxu0 0
      %1383 = vmatprep.subr.bf16.mxu0 0
      %1384 = vmatpush1.bf16.msra.mxu0 0
      %1385 = vmatprep.mubr.bf16.mxu0 0
      %1386 = vmatmul.mubr.bf16.gmra.mrb[0].mxu0 %v1266
      %v1387 = vpop.f32.mrb[0].mxu0
      %v1388 = vadd.f32 %v1303, %v1387
      %v1389 = vpop.f32.mrb[0].mxu0
      %v1390 = vpop.f32.mrb[0].mxu0
      %v1391 = vadd.f32 %v1303, %v1390
      %v1392 = vpop.f32.mrb[0].mxu0
      %1393 = vmatprep.mubr.bf16.mxu0 0
      %1394 = vmatmul.mubr.bf16.gmra.mrb[0].mxu0 %v1267
      %v1395 = vpop.f32.mrb[0].mxu0
      %v1396 = vadd.f32 %v1303, %v1395
      %v1397 = vpop.f32.mrb[0].mxu0
      %v1398 = vpop.f32.mrb[0].mxu0
      %v1399 = vadd.f32 %v1303, %v1398
      %v1400 = vpop.f32.mrb[0].mxu0
      %1401 = vmatprep.mubr.bf16.mxu0 0
      %1402 = vmatmul.mubr.bf16.gmra.mrb[0].mxu0 %v1268
      %v1403 = vpop.f32.mrb[0].mxu0
      %v1404 = vadd.f32 %v1303, %v1403
      %v1405 = vpop.f32.mrb[0].mxu0
      %v1406 = vpop.f32.mrb[0].mxu0
      %v1407 = vadd.f32 %v1303, %v1406
      %v1408 = vpop.f32.mrb[0].mxu0
      %1409 = vmatprep.mubr.bf16.mxu0 0
      %1410 = vmatmul.mubr.bf16.gmra.mrb[0].mxu0 %v1269
      %v1411 = vpop.f32.mrb[0].mxu0
      %v1412 = vadd.f32 %v1303, %v1411
      %v1413 = vpop.f32.mrb[0].mxu0
      %v1414 = vpop.f32.mrb[0].mxu0
      %v1415 = vadd.f32 %v1303, %v1414
      %v1416 = vpop.f32.mrb[0].mxu0
      %1417 = vmatprep.mubr.bf16.mxu0 0
      %1418 = vmatmul.mubr.bf16.gmra.mrb[0].mxu0 %v1270
      %v1419 = vpop.f32.mrb[0].mxu0
      %v1420 = vadd.f32 %v1303, %v1419
      %v1421 = vpop.f32.mrb[0].mxu0
      %v1422 = vpop.f32.mrb[0].mxu0
      %v1423 = vadd.f32 %v1303, %v1422
      %v1424 = vpop.f32.mrb[0].mxu0
      %1425 = vmatprep.mubr.bf16.mxu0 0
      %1426 = vmatmul.mubr.bf16.gmra.mrb[0].mxu0 %v1271
      %v1427 = vpop.f32.mrb[0].mxu0
      %v1428 = vadd.f32 %v1303, %v1427
      %v1429 = vpop.f32.mrb[0].mxu0
      %v1430 = vpop.f32.mrb[0].mxu0
      %v1431 = vadd.f32 %v1303, %v1430
      %v1432 = vpop.f32.mrb[0].mxu0
      %1433 = vmatprep.mubr.bf16.mxu0 0
      %1434 = vmatmul.mubr.bf16.gmra.mrb[0].mxu0 %v1272
      %v1435 = vpop.f32.mrb[0].mxu0
      %v1436 = vadd.f32 %v1303, %v1435
      %v1437 = vpop.f32.mrb[0].mxu0
      %v1438 = vpop.f32.mrb[0].mxu0
      %v1439 = vadd.f32 %v1303, %v1438
      %v1440 = vpop.f32.mrb[0].mxu0
      %1441 = vmatprep.mubr.bf16.mxu0 0
      %1442 = vmatmul.mubr.bf16.gmra.mrb[0].mxu0 %v1273
      %v1443 = vpop.f32.mrb[0].mxu0
      %v1444 = vadd.f32 %v1303, %v1443
      %v1445 = vpop.f32.mrb[0].mxu0
      %v1446 = vpop.f32.mrb[0].mxu0
      %v1447 = vadd.f32 %v1303, %v1446
      %v1448 = vpop.f32.mrb[0].mxu0
      %1449 = vmatprep.mubr.bf16.mxu0 0
      %1450 = vmatmul.mubr.bf16.gmra.mrb[0].mxu0 %v1274
      %v1451 = vpop.f32.mrb[0].mxu0
      %v1452 = vadd.f32 %v1303, %v1451
      %v1453 = vpop.f32.mrb[0].mxu0
      %v1454 = vpop.f32.mrb[0].mxu0
      %v1455 = vadd.f32 %v1303, %v1454
      %v1456 = vpop.f32.mrb[0].mxu0
      %1457 = vmatprep.mubr.bf16.mxu0 0
      %1458 = vmatmul.mubr.bf16.gmra.mrb[0].mxu0 %v1275
      %v1459 = vpop.f32.mrb[0].mxu0
      %v1460 = vadd.f32 %v1303, %v1459
      %v1461 = vpop.f32.mrb[0].mxu0
      %v1462 = vpop.f32.mrb[0].mxu0
      %v1463 = vadd.f32 %v1303, %v1462
      %v1464 = vpop.f32.mrb[0].mxu0
      %1465 = vmatprep.mubr.bf16.mxu0 0
      %1466 = vmatmul.mubr.bf16.gmra.mrb[0].mxu0 %v1276
      %v1467 = vpop.f32.mrb[0].mxu0
      %v1468 = vadd.f32 %v1303, %v1467
      %v1469 = vpop.f32.mrb[0].mxu0
      %v1470 = vpop.f32.mrb[0].mxu0
      %v1471 = vadd.f32 %v1303, %v1470
      %v1472 = vpop.f32.mrb[0].mxu0
      %1473 = vmatprep.mubr.bf16.mxu0 0
      %1474 = vmatmul.mubr.bf16.gmra.mrb[0].mxu0 %v1277
      %v1475 = vpop.f32.mrb[0].mxu0
      %v1476 = vadd.f32 %v1303, %v1475
      %v1477 = vpop.f32.mrb[0].mxu0
      %v1478 = vpop.f32.mrb[0].mxu0
      %v1479 = vadd.f32 %v1303, %v1478
      %v1480 = vpop.f32.mrb[0].mxu0
      %1481 = vmatprep.mubr.bf16.mxu0 0
      %1482 = vmatmul.mubr.bf16.gmra.mrb[0].mxu0 %v1278
      %v1483 = vpop.f32.mrb[0].mxu0
      %v1484 = vadd.f32 %v1303, %v1483
      %v1485 = vpop.f32.mrb[0].mxu0
      %v1486 = vpop.f32.mrb[0].mxu0
      %v1487 = vadd.f32 %v1303, %v1486
      %v1488 = vpop.f32.mrb[0].mxu0
      %1489 = vmatprep.mubr.bf16.mxu0 0
      %1490 = vmatmul.mubr.bf16.gmra.mrb[0].mxu0 %v1279
      %v1491 = vpop.f32.mrb[0].mxu0
      %v1492 = vadd.f32 %v1303, %v1491
      %v1493 = vpop.f32.mrb[0].mxu0
      %v1494 = vpop.f32.mrb[0].mxu0
      %v1495 = vadd.f32 %v1303, %v1494
      %v1496 = vpop.f32.mrb[0].mxu0
      %1497 = vmatprep.mubr.bf16.mxu0 0
      %1498 = vmatmul.mubr.bf16.gmra.mrb[0].mxu0 %v1280
      %v1499 = vpop.f32.mrb[0].mxu0
      %v1500 = vadd.f32 %v1303, %v1499
      %v1501 = vpop.f32.mrb[0].mxu0
      %v1502 = vpop.f32.mrb[0].mxu0
      %v1503 = vadd.f32 %v1303, %v1502
      %v1504 = vpop.f32.mrb[0].mxu0
      %1505 = vmatprep.mubr.bf16.mxu0 0
      %1506 = vmatmul.mubr.bf16.gmra.mrb[0].mxu0 %v1281
      %v1507 = vpop.f32.mrb[0].mxu0
      %v1508 = vadd.f32 %v1303, %v1507
      %v1509 = vpop.f32.mrb[0].mxu0
      %v1510 = vpop.f32.mrb[0].mxu0
      %v1511 = vadd.f32 %v1303, %v1510
      %v1512 = vpop.f32.mrb[0].mxu0
      %1513 = vdwg.mxu0
      %vm1514 = vcmask 23552
      %1515 = vst.msk [vmem:[%s356] sm:$0xff] %vm1514, %v1388
      %1516 = vst.msk [vmem:[%s356 + $0x8] sm:$0xff] %vm1514, %v1391
      %1517 = vst.msk [vmem:[%s356 + $0x10] sm:$0xff] %vm1514, %v1396
      %1518 = vst.msk [vmem:[%s356 + $0x18] sm:$0xff] %vm1514, %v1399
      %1519 = vst.msk [vmem:[%s356 + $0x20] sm:$0xff] %vm1514, %v1404
      %1520 = vst.msk [vmem:[%s356 + $0x28] sm:$0xff] %vm1514, %v1407
      %1521 = vst.msk [vmem:[%s356 + $0x30] sm:$0xff] %vm1514, %v1412
      %1522 = vst.msk [vmem:[%s356 + $0x38] sm:$0xff] %vm1514, %v1415
      %1523 = vst.msk [vmem:[%s356 + $0x40] sm:$0xff] %vm1514, %v1420
      %1524 = vst.msk [vmem:[%s356 + $0x48] sm:$0xff] %vm1514, %v1423
      %1525 = vst.msk [vmem:[%s356 + $0x50] sm:$0xff] %vm1514, %v1428
      %1526 = vst.msk [vmem:[%s356 + $0x58] sm:$0xff] %vm1514, %v1431
      %1527 = vst.msk [vmem:[%s356 + $0x60] sm:$0xff] %vm1514, %v1436
      %1528 = vst.msk [vmem:[%s356 + $0x68] sm:$0xff] %vm1514, %v1439
      %1529 = vst.msk [vmem:[%s356 + $0x70] sm:$0xff] %vm1514, %v1444
      %1530 = vst.msk [vmem:[%s356 + $0x78] sm:$0xff] %vm1514, %v1447
      %1531 = vst.msk [vmem:[%s356 + $0x80] sm:$0xff] %vm1514, %v1452
      %1532 = vst.msk [vmem:[%s356 + $0x88] sm:$0xff] %vm1514, %v1455
      %1533 = vst.msk [vmem:[%s356 + $0x90] sm:$0xff] %vm1514, %v1460
      %1534 = vst.msk [vmem:[%s356 + $0x98] sm:$0xff] %vm1514, %v1463
      %1535 = vst.msk [vmem:[%s356 + $0xa0] sm:$0xff] %vm1514, %v1468
      %1536 = vst.msk [vmem:[%s356 + $0xa8] sm:$0xff] %vm1514, %v1471
      %1537 = vst.msk [vmem:[%s356 + $0xb0] sm:$0xff] %vm1514, %v1476
      %1538 = vst.msk [vmem:[%s356 + $0xb8] sm:$0xff] %vm1514, %v1479
      %1539 = vst.msk [vmem:[%s356 + $0xc0] sm:$0xff] %vm1514, %v1484
      %1540 = vst.msk [vmem:[%s356 + $0xc8] sm:$0xff] %vm1514, %v1487
      %1541 = vst.msk [vmem:[%s356 + $0xd0] sm:$0xff] %vm1514, %v1492
      %1542 = vst.msk [vmem:[%s356 + $0xd8] sm:$0xff] %vm1514, %v1495
      %1543 = vst.msk [vmem:[%s356 + $0xe0] sm:$0xff] %vm1514, %v1500
      %1544 = vst.msk [vmem:[%s356 + $0xe8] sm:$0xff] %vm1514, %v1503
      %1545 = vst.msk [vmem:[%s356 + $0xf0] sm:$0xff] %vm1514, %v1508
      %1546 = vst.msk [vmem:[%s356 + $0xf8] sm:$0xff] %vm1514, %v1511
      %s1547 = smul.u32 32, %s20
      %p1548 = scmp.lt.s32.totalorder %s1547, 127
      %s1549 = scalar_select %p1548, %s1547, 127
      %s1550 = smul.addr %s1549, 8
      %s1551 = scalar_lea.vmem %s9, %s1550
      // Predicated region
      $region57: #{tpu_custom_call.1} parent=55 // pred_check
        %p1552 = pneg %p237
      $region58: #{tpu_custom_call.1} parent=55 // pred_check_branch
        %1554 = sbr.rel (%p1552) target = $region60
      $region59: #{tpu_custom_call.1} parent=55 // pred_region
        %s1555 = smul.u32 32, %s20
      $region60: #{tpu_custom_call.1} parent=55 // pred_fallthru
        _
    $region56: #{tpu_custom_call.1} parent=5 // pred_fallthru
      _
    %p1556 = scmp.le.s32.totalorder 2, %s15
    // Predicated region
    $region61: #{tpu_custom_call.1} parent=5 // pred_check
      %p1557 = pneg %p1556
    $region62: #{tpu_custom_call.1} parent=5 // pred_check_branch
      %1559 = sbr.rel (%p1557) target = $region64
    $region63: #{tpu_custom_call.1} parent=5 // pred_region
      %s1560 = ssub.s32 %s15, 2
      // Predicated region
      $region65: #{tpu_custom_call.1} parent=63 // pred_check
        %p1561 = pneg %p243
      $region66: #{tpu_custom_call.1} parent=63 // pred_check_branch
        %1563 = sbr.rel (%p1561) target = $region68
      $region67: #{tpu_custom_call.1} parent=63 // pred_region
        %s1564 = smul.u32 32, %s21
        %p1565 = scmp.lt.s32.totalorder %s1564, 127
        %s1566 = scalar_select %p1565, %s1564, 127
        %s1567 = smul.addr %s1566, 8
        %s1568 = scalar_lea.vmem %s9, %s1567
      $region68: #{tpu_custom_call.1} parent=63 // pred_fallthru
        _
    $region64: #{tpu_custom_call.1} parent=5 // pred_fallthru
      _
  $region6: #{tpu_custom_call.1} parent=0 // loop_footer
    %s19 = sadd.s32 1, %s15
  $region7: #{tpu_custom_call.1} parent=0 // loop_footer_branch
    %14 = sbr.rel target = $region3
  $region8: #{tpu_custom_call.1} parent=0 // loop_exit
    _

</llo_original>
